<compile_context>
chip_gen: v5e
topology: v5e:2x2
jax: 0.10.0
libtpu: 0.0.40
codegen_flags: <defaults>
</compile_context>

<pallas_src>
import functools

import jax
import jax.numpy as jnp
from jax.experimental import pallas as pl
from jax.experimental.pallas import tpu as pltpu

EPS = 1e-5
VMEM_LIMIT = 32 * 1024 * 1024


# ----------------------------- Pallas kernels ------------------------------ #

def _conv3x3_bn_kernel(x_ref, w_ref, scale_ref, bias_ref, *out_refs,
                       stride, Ho, Wo, relu, with_pool):
    """One batch image: 3x3 conv as 9 accumulating MXU matmuls over statically
    shifted windows of the phase-split padded input, + folded BN (+ReLU)."""
    Cin = w_ref.shape[1]
    Cout = w_ref.shape[2]
    P = x_ref.shape[1]

    # Load each phase plane once (aligned full-block bf16 load), unpack to f32
    # so the unaligned window slices / reshapes below stay on unpacked layouts.
    planes = [x_ref[0, p].astype(jnp.float32) for p in range(P)]

    acc = jnp.zeros((Ho * Wo, Cout), jnp.float32)
    for kh in range(3):
        for kw in range(3):
            t = kh * 3 + kw
            pi = (kh % stride) * stride + (kw % stride)     # phase index
            r0 = kh // stride                               # static row offset
            c0 = kw // stride                               # static col offset
            win = planes[pi][r0:r0 + Ho, c0:c0 + Wo, :]     # (Ho, Wo, Cin) f32
            lhs = win.reshape(Ho * Wo, Cin).astype(jnp.bfloat16)
            acc = acc + jnp.dot(lhs, w_ref[t],
                                preferred_element_type=jnp.float32)

    y = acc * scale_ref[...] + bias_ref[...]                # f32 BN affine
    if with_pool:                                           # SE squeeze (f32)
        out_refs[1][0] = jnp.mean(y, axis=0, keepdims=True)
    if relu:
        y = jnp.maximum(y, 0.0)
    out_refs[0][0] = y.astype(out_refs[0].dtype)


def _matmul_bn_kernel(x_ref, w_ref, scale_ref, bias_ref, o_ref, *, relu):
    acc = jnp.dot(x_ref[...], w_ref[...], preferred_element_type=jnp.float32)
    y = acc * scale_ref[...] + bias_ref[...]
    if relu:
        y = jnp.maximum(y, 0.0)
    o_ref[...] = y.astype(o_ref.dtype)


def _gate_residual_kernel(a_ref, sc_ref, g_ref, o_ref):
    a = a_ref[0].astype(jnp.float32)
    sc = sc_ref[0].astype(jnp.float32)
    g = g_ref[0].astype(jnp.float32)            # (1, L), broadcasts over rows
    o_ref[0] = jnp.maximum(a * g + sc, 0.0).astype(o_ref.dtype)


# ------------------------------ wrappers ------------------------------------ #

def make_phases(x, stride):
    """x: (N, H, W, C) -> (N, stride**2, Hph, Wph, C) strided phases of the
    zero-padded (pad=1) input.  HBM footprint ~= the padded input (no 9x
    im2col); in-kernel windowing then needs only static, contiguous offsets."""
    N, H, W, C = x.shape
    Ho = (H - 1) // stride + 1
    Wo = (W - 1) // stride + 1
    Hph = 2 // stride + Ho
    Wph = 2 // stride + Wo
    xp = jnp.pad(x, ((0, 0), (1, stride * Hph - H - 1),
                     (1, stride * Wph - W - 1), (0, 0)))
    phases = [xp[:, a::stride, b::stride, :]
              for a in range(stride) for b in range(stride)]
    return jnp.stack(phases, axis=1), Ho, Wo


def conv3x3_bn(x, w_taps, scale, bias, *, stride, relu, with_pool=False,
               out_dtype=jnp.bfloat16):
    """3x3 pad-1 conv + folded BN (+ReLU).  x: (N,H,W,Cin) -> (N, Ho*Wo, Cout).
    If with_pool, also returns the (N, 1, Cout) f32 global average pool of the
    pre-ReLU output (the SE squeeze, computed as a side output)."""
    N, H, W, Cin = x.shape
    Cout = w_taps.shape[2]
    phases, Ho, Wo = make_phases(x.astype(jnp.bfloat16), stride)
    P, Hph, Wph = phases.shape[1], phases.shape[2], phases.shape[3]

    out_shape = [jax.ShapeDtypeStruct((N, Ho * Wo, Cout), out_dtype)]
    out_specs = [pl.BlockSpec((1, Ho * Wo, Cout), lambda b: (b, 0, 0))]
    if with_pool:
        out_shape.append(jax.ShapeDtypeStruct((N, 1, Cout), jnp.float32))
        out_specs.append(pl.BlockSpec((1, 1, Cout), lambda b: (b, 0, 0)))

    kernel = functools.partial(_conv3x3_bn_kernel, stride=stride, Ho=Ho, Wo=Wo,
                               relu=relu, with_pool=with_pool)
    flops = 2 * N * Ho * Wo * 9 * Cin * Cout
    bytes_accessed = (phases.size * 2 + w_taps.size * 2
                      + N * Ho * Wo * Cout * jnp.dtype(out_dtype).itemsize)

    # NOTE: per-image grid is enough for these small spatial sizes; large
    # H*W layers would additionally tile output rows (halo via manual DMA).
    outs = pl.pallas_call(
        kernel,
        out_shape=tuple(out_shape),
        grid=(N,),
        in_specs=[
            pl.BlockSpec((1, P, Hph, Wph, Cin), lambda b: (b, 0, 0, 0, 0)),
            pl.BlockSpec((9, Cin, Cout), lambda b: (0, 0, 0)),
            pl.BlockSpec((1, Cout), lambda b: (0, 0)),
            pl.BlockSpec((1, Cout), lambda b: (0, 0)),
        ],
        out_specs=tuple(out_specs),
        compiler_params=pltpu.CompilerParams(
            dimension_semantics=("parallel",), vmem_limit_bytes=VMEM_LIMIT),
        cost_estimate=pl.CostEstimate(flops=flops, transcendentals=0,
                                      bytes_accessed=int(bytes_accessed)),
    )(phases, w_taps, scale.reshape(1, Cout).astype(jnp.float32),
      bias.reshape(1, Cout).astype(jnp.float32))

    if with_pool:
        out, pooled = outs
    else:
        out, pooled = outs[0], None
    return out, pooled, Ho, Wo


def matmul_bn(x, w, scale, bias, *, relu, out_dtype=jnp.float32):
    """(M, K) @ (K, Cout) with folded-BN affine and optional ReLU.
    bf16 MXU operands, f32 accumulate/affine; M tiled via cdiv + zero padding."""
    M, K = x.shape
    Cout = w.shape[1]
    TM = 512 if M >= 512 else max(8, -(-M // 8) * 8)
    Mp = -(-M // TM) * TM
    xb = x.astype(jnp.bfloat16)
    if Mp != M:
        xb = jnp.pad(xb, ((0, Mp - M), (0, 0)))
    out = pl.pallas_call(
        functools.partial(_matmul_bn_kernel, relu=relu),
        out_shape=jax.ShapeDtypeStruct((Mp, Cout), out_dtype),
        grid=(Mp // TM,),
        in_specs=[
            pl.BlockSpec((TM, K), lambda i: (i, 0)),
            pl.BlockSpec((K, Cout), lambda i: (0, 0)),
            pl.BlockSpec((1, Cout), lambda i: (0, 0)),
            pl.BlockSpec((1, Cout), lambda i: (0, 0)),
        ],
        out_specs=pl.BlockSpec((TM, Cout), lambda i: (i, 0)),
        compiler_params=pltpu.CompilerParams(
            dimension_semantics=("parallel",), vmem_limit_bytes=VMEM_LIMIT),
        cost_estimate=pl.CostEstimate(
            flops=2 * Mp * K * Cout, transcendentals=0,
            bytes_accessed=int(Mp * K * 2 + K * Cout * 2
                               + Mp * Cout * jnp.dtype(out_dtype).itemsize)),
    )(xb, w.astype(jnp.bfloat16),
      scale.reshape(1, Cout).astype(jnp.float32),
      bias.reshape(1, Cout).astype(jnp.float32))
    return out[:M]


def gate_residual(out2, shortcut, gate):
    """relu(out2 * gate[n, c] + shortcut), streamed with a lane-dense layout.
    out2/shortcut: (N, HW, C); gate: (N, C).  Returns (N, HW, C) f32."""
    N, HW, C = out2.shape
    if C % 128 != 0 and 128 % C == 0 and (HW * C) % 128 == 0:
        # Fold (HW, C) -> (HW*C/128, 128): unmasked lane-dense loads/stores.
        # The per-(n, c) gate becomes a tiled 128-wide vector (128 % C == 0).
        L = 128
        R = HW * C // L
        a = out2.reshape(N, R, L)
        s = shortcut.reshape(N, R, L)
        g = jnp.tile(gate, (1, L // C)).reshape(N, 1, L)
    else:
        R, L = HW, C
        a, s = out2, shortcut
        g = gate.reshape(N, 1, C)
    y = pl.pallas_call(
        _gate_residual_kernel,
        out_shape=jax.ShapeDtypeStruct((N, R, L), jnp.float32),
        grid=(N,),
        in_specs=[
            pl.BlockSpec((1, R, L), lambda b: (b, 0, 0)),
            pl.BlockSpec((1, R, L), lambda b: (b, 0, 0)),
            pl.BlockSpec((1, 1, L), lambda b: (b, 0, 0)),
        ],
        out_specs=pl.BlockSpec((1, R, L), lambda b: (b, 0, 0)),
        compiler_params=pltpu.CompilerParams(
            dimension_semantics=("parallel",), vmem_limit_bytes=VMEM_LIMIT),
        cost_estimate=pl.CostEstimate(
            flops=3 * N * R * L, transcendentals=0,
            bytes_accessed=int(N * R * L * (out2.dtype.itemsize
                                            + shortcut.dtype.itemsize + 4)
                               + N * L * 4)),
    )(a, s, g)
    return y.reshape(N, HW, C)


# --------------------------- weight preparation ----------------------------- #

def fold_bn(gamma, beta, mean, var):
    scale = gamma / jnp.sqrt(var + EPS)
    return scale.astype(jnp.float32), (beta - mean * scale).astype(jnp.float32)


def conv3x3_taps(w_oihw):
    """(Cout, Cin, 3, 3) -> (9, Cin, Cout) bf16, tap t = kh*3 + kw."""
    cout, cin = w_oihw.shape[0], w_oihw.shape[1]
    return (jnp.transpose(w_oihw, (2, 3, 1, 0))
            .reshape(9, cin, cout).astype(jnp.bfloat16))


def prepare_params(params, in_channels, channels, stride):
    """One-time preprocessing: weight transposes, BN folding, bf16 casts."""
    prep = {
        "w1": conv3x3_taps(params["conv1_w"]),
        "w2": conv3x3_taps(params["conv2_w"]),
        "fc1_w": jnp.transpose(params["fc1_w"][:, :, 0, 0]).astype(jnp.float32),
        "fc1_b": params["fc1_b"].astype(jnp.float32),
        "fc2_w": jnp.transpose(params["fc2_w"][:, :, 0, 0]).astype(jnp.float32),
        "fc2_b": params["fc2_b"].astype(jnp.float32),
    }
    prep["s1"], prep["b1"] = fold_bn(*params["bn1"])
    prep["s2"], prep["b2"] = fold_bn(*params["bn2"])
    if stride != 1 or in_channels != channels:
        prep["wsc"] = (jnp.transpose(params["sc_w"], (2, 3, 1, 0))
                       .reshape(in_channels, channels).astype(jnp.bfloat16))
        prep["ssc"], prep["bsc"] = fold_bn(*params["bn_sc"])
    return prep


# -------------------------------- forward ----------------------------------- #

def basic_block_forward(x, prep, *, stride):
    """x: (N, H, W, Cin) f32, prep: prepare_params(...).  Returns NHWC f32."""
    N, H, W, Cin = x.shape
    C = prep["w1"].shape[2]

    # conv1 (3x3, stride) + bn1 + relu
    out1, _, Ho, Wo = conv3x3_bn(x, prep["w1"], prep["s1"], prep["b1"],
                                 stride=stride, relu=True)
    out1 = out1.reshape(N, Ho, Wo, C)

    # conv2 (3x3, stride 1) + bn2; emits the SE global avg-pool as side output
    out2, pooled, _, _ = conv3x3_bn(out1, prep["w2"], prep["s2"], prep["b2"],
                                    stride=1, relu=False, with_pool=True)

    # shortcut: identity, or 1x1 conv (stride) + BN
    if "wsc" in prep:
        xs = x[:, ::stride, ::stride, :].reshape(N * Ho * Wo, Cin)
        sc = matmul_bn(xs, prep["wsc"], prep["ssc"], prep["bsc"],
                       relu=False, out_dtype=jnp.float32)
        sc = sc.reshape(N, Ho * Wo, C)
    else:
        sc = x.reshape(N, Ho * Wo, C)

    # SE excitation on the pooled (N, C) matrix -- tiny matmuls, kept in plain
    # JAX per perf review (1-row matmuls waste the MXU), all in f32.
    m = pooled[:, 0, :]                                        # (N, C)
    h = jax.nn.relu(m @ prep["fc1_w"] + prep["fc1_b"])         # (N, C//16)
    gate = jax.nn.sigmoid(h @ prep["fc2_w"] + prep["fc2_b"])   # (N, C)

    # channel gating + residual add + final relu (streaming Pallas kernel)
    y = gate_residual(out2, sc, gate)
    return y.reshape(N, Ho, Wo, C)


# ------------------------- pure-JAX reference ------------------------------ #

def ref_forward(x, params, stride):
    def conv(xx, w_oihw, s, pad):
        w = jnp.transpose(w_oihw, (2, 3, 1, 0))  # OIHW -> HWIO
        return jax.lax.conv_general_dilated(
            xx, w, (s, s), ((pad, pad), (pad, pad)),
            dimension_numbers=("NHWC", "HWIO", "NHWC"))

    def bn(xx, gamma, beta, mean, var):
        return (xx - mean) * (gamma / jnp.sqrt(var + EPS)) + beta

    out = jax.nn.relu(bn(conv(x, params["conv1_w"], stride, 1), *params["bn1"]))
    out = bn(conv(out, params["conv2_w"], 1, 1), *params["bn2"])
    w = jnp.mean(out, axis=(1, 2), keepdims=True)
    w = jax.nn.relu(conv(w, params["fc1_w"], 1, 0) + params["fc1_b"])
    w = jax.nn.sigmoid(conv(w, params["fc2_w"], 1, 0) + params["fc2_b"])
    out = out * w
    if stride != 1 or x.shape[-1] != params["conv1_w"].shape[0]:
        sc = bn(conv(x, params["sc_w"], stride, 0), *params["bn_sc"])
    else:
        sc = x
    return jax.nn.relu(out + sc)


# ------------------------------ params ------------------------------------- #

def init_params(key, cin, c):
    cr = c // 16
    ks = jax.random.split(key, 10)

    def w(k, shape, scale=0.1):
        return scale * jax.random.normal(k, shape, jnp.float32)

    def bn_params(k):
        k1, k2, k3, k4 = jax.random.split(k, 4)
        gamma = 1.0 + 0.1 * jax.random.normal(k1, (c,), jnp.float32)
        beta = 0.1 * jax.random.normal(k2, (c,), jnp.float32)
        mean = 0.1 * jax.random.normal(k3, (c,), jnp.float32)
        var = 1.0 + 0.1 * jax.random.uniform(k4, (c,), jnp.float32)
        return (gamma, beta, mean, var)

    return {
        "conv1_w": w(ks[0], (c, cin, 3, 3)),
        "bn1": bn_params(ks[1]),
        "conv2_w": w(ks[2], (c, c, 3, 3)),
        "bn2": bn_params(ks[3]),
        "sc_w": w(ks[4], (c, cin, 1, 1)),
        "bn_sc": bn_params(ks[5]),
        "fc1_w": w(ks[6], (cr, c, 1, 1)),
        "fc1_b": w(ks[7], (cr,)),
        "fc2_w": w(ks[8], (c, cr, 1, 1)),
        "fc2_b": w(ks[9], (c,)),
    }


if __name__ == "__main__":
    key = jax.random.PRNGKey(0)
    kx, kp = jax.random.split(key)

    # in_channels=16, channels=32, stride=2 -> exercises the conv+BN shortcut.
    N, H, W, Cin, C, stride = 2, 16, 16, 16, 32, 2
    x = jax.random.normal(kx, (N, H, W, Cin), jnp.float32)
    params = init_params(kp, Cin, C)

    prep = prepare_params(params, Cin, C, stride)      # one-time weight prep
    fwd = jax.jit(functools.partial(basic_block_forward, stride=stride))

    y = jax.block_until_ready(fwd(x, prep))
    y_ref = jax.block_until_ready(ref_forward(x, params, stride))

    assert y.shape == (N, H // stride, W // stride, C)
    err = float(jnp.max(jnp.abs(y - y_ref)))
    if not bool(jnp.allclose(y, y_ref, atol=5e-2, rtol=5e-2)):
        raise AssertionError(f"mismatch vs reference, max abs err = {err}")
    print("KERNEL_OK")
</pallas_src>

<mosaic_0001>
module attributes {stable_mosaic.version = 11 : i64} {
  func.func @_matmul_bn_kernel(%arg0: i32, %arg1: memref<128x16xbf16, #tpu.memory_space<vmem>>, %arg2: memref<16x32xbf16, #tpu.memory_space<vmem>>, %arg3: memref<1x32xf32, #tpu.memory_space<vmem>>, %arg4: memref<1x32xf32, #tpu.memory_space<vmem>>, %arg5: memref<128x32xf32, #tpu.memory_space<vmem>>) attributes {dimension_semantics = [#tpu.dimension_semantics<parallel>], iteration_bounds = array<i64: 1>, scalar_prefetch = 0 : i64, scratch_operands = 0 : i64, tpu.core_type = #tpu.core_type<tc>, window_params = [{transform_indices = @transform_0, window_bounds = array<i64: 128, 16>}, {pipeline_mode = #tpu.pipeline_mode<synchronous>, transform_indices = @transform_1, window_bounds = array<i64: 16, 32>}, {pipeline_mode = #tpu.pipeline_mode<synchronous>, transform_indices = @transform_2, window_bounds = array<i64: 1, 32>}, {pipeline_mode = #tpu.pipeline_mode<synchronous>, transform_indices = @transform_3, window_bounds = array<i64: 1, 32>}, {transform_indices = @transform_4, window_bounds = array<i64: 128, 32>}]} {
    %c0 = arith.constant 0 : index
    %c0_0 = arith.constant 0 : index
    %0 = vector.load %arg1[%c0, %c0_0] : memref<128x16xbf16, #tpu.memory_space<vmem>>, vector<128x16xbf16>
    %c0_1 = arith.constant 0 : index
    %c0_2 = arith.constant 0 : index
    %1 = vector.load %arg2[%c0_1, %c0_2] : memref<16x32xbf16, #tpu.memory_space<vmem>>, vector<16x32xbf16>
    %cst = arith.constant dense<0.000000e+00> : vector<128x32xf32>
    %2 = tpu.matmul %0, %1, %cst {dimension_numbers = #tpu.dot_dimension_numbers<[1], [0], [0], [1], [0, 0, 1, 1], [], []>} : vector<128x16xbf16>, vector<16x32xbf16>, vector<128x32xf32> -> vector<128x32xf32>
    %c0_3 = arith.constant 0 : index
    %c0_4 = arith.constant 0 : index
    %3 = vector.load %arg3[%c0_3, %c0_4] : memref<1x32xf32, #tpu.memory_space<vmem>>, vector<1x32xf32>
    %4 = vector.broadcast %3 : vector<1x32xf32> to vector<128x32xf32>
    %5 = arith.mulf %2, %4 : vector<128x32xf32>
    %c0_5 = arith.constant 0 : index
    %c0_6 = arith.constant 0 : index
    %6 = vector.load %arg4[%c0_5, %c0_6] : memref<1x32xf32, #tpu.memory_space<vmem>>, vector<1x32xf32>
    %7 = vector.broadcast %6 : vector<1x32xf32> to vector<128x32xf32>
    %8 = arith.addf %5, %7 : vector<128x32xf32>
    %c0_7 = arith.constant 0 : index
    %c0_8 = arith.constant 0 : index
    %9 = vector.load %arg5[%c0_7, %c0_8] : memref<128x32xf32, #tpu.memory_space<vmem>>, vector<128x32xf32>
    tpu.vector_store %arg5[%c0_7, %c0_8], %8 {strides = array<i32>} : memref<128x32xf32, #tpu.memory_space<vmem>>, vector<128x32xf32>,
    return
  }
  func.func @transform_0(%arg0: i32) -> (i32, i32) {
    %c0_i32 = arith.constant 0 : i32
    %c0_i32_0 = arith.constant 0 : i32
    return %arg0, %c0_i32 : i32, i32
  }
  func.func @transform_1(%arg0: i32) -> (i32, i32) {
    %c0_i32 = arith.constant 0 : i32
    %c0_i32_0 = arith.constant 0 : i32
    %c0_i32_1 = arith.constant 0 : i32
    return %c0_i32, %c0_i32_0 : i32, i32
  }
  func.func @transform_2(%arg0: i32) -> (i32, i32) {
    %c0_i32 = arith.constant 0 : i32
    %c0_i32_0 = arith.constant 0 : i32
    %c0_i32_1 = arith.constant 0 : i32
    return %c0_i32, %c0_i32_0 : i32, i32
  }
  func.func @transform_3(%arg0: i32) -> (i32, i32) {
    %c0_i32 = arith.constant 0 : i32
    %c0_i32_0 = arith.constant 0 : i32
    %c0_i32_1 = arith.constant 0 : i32
    return %c0_i32, %c0_i32_0 : i32, i32
  }
  func.func @transform_4(%arg0: i32) -> (i32, i32) {
    %c0_i32 = arith.constant 0 : i32
    %c0_i32_0 = arith.constant 0 : i32
    return %arg0, %c0_i32 : i32, i32
  }
}

module attributes {stable_mosaic.version = 11 : i64} {
  func.func @_conv3x3_bn_kernel(%arg0: i32, %arg1: memref<1x4x9x9x16xbf16, #tpu.memory_space<vmem>>, %arg2: memref<9x16x32xbf16, #tpu.memory_space<vmem>>, %arg3: memref<1x32xf32, #tpu.memory_space<vmem>>, %arg4: memref<1x32xf32, #tpu.memory_space<vmem>>, %arg5: memref<1x64x32xbf16, #tpu.memory_space<vmem>>) attributes {dimension_semantics = [#tpu.dimension_semantics<parallel>], iteration_bounds = array<i64: 2>, scalar_prefetch = 0 : i64, scratch_operands = 0 : i64, tpu.core_type = #tpu.core_type<tc>, window_params = [{transform_indices = @transform_0, window_bounds = array<i64: 1, 4, 9, 9, 16>}, {pipeline_mode = #tpu.pipeline_mode<synchronous>, transform_indices = @transform_1, window_bounds = array<i64: 9, 16, 32>}, {pipeline_mode = #tpu.pipeline_mode<synchronous>, transform_indices = @transform_2, window_bounds = array<i64: 1, 32>}, {pipeline_mode = #tpu.pipeline_mode<synchronous>, transform_indices = @transform_3, window_bounds = array<i64: 1, 32>}, {transform_indices = @transform_4, window_bounds = array<i64: 1, 64, 32>}]} {
    %c0 = arith.constant 0 : index
    %c0_0 = arith.constant 0 : index
    %c0_1 = arith.constant 0 : index
    %c0_2 = arith.constant 0 : index
    %c0_3 = arith.constant 0 : index
    %0 = vector.load %arg1[%c0, %c0_0, %c0_1, %c0_2, %c0_3] : memref<1x4x9x9x16xbf16, #tpu.memory_space<vmem>>, vector<1x1x9x9x16xbf16>
    %1 = vector.shape_cast %0 : vector<1x1x9x9x16xbf16> to vector<9x9x16xbf16>
    %2 = arith.extf %1 : vector<9x9x16xbf16> to vector<9x9x16xf32>
    %c0_4 = arith.constant 0 : index
    %c1 = arith.constant 1 : index
    %c0_5 = arith.constant 0 : index
    %c0_6 = arith.constant 0 : index
    %c0_7 = arith.constant 0 : index
    %3 = vector.load %arg1[%c0_4, %c1, %c0_5, %c0_6, %c0_7] : memref<1x4x9x9x16xbf16, #tpu.memory_space<vmem>>, vector<1x1x9x9x16xbf16>
    %4 = vector.shape_cast %3 : vector<1x1x9x9x16xbf16> to vector<9x9x16xbf16>
    %5 = arith.extf %4 : vector<9x9x16xbf16> to vector<9x9x16xf32>
    %c0_8 = arith.constant 0 : index
    %c2 = arith.constant 2 : index
    %c0_9 = arith.constant 0 : index
    %c0_10 = arith.constant 0 : index
    %c0_11 = arith.constant 0 : index
    %6 = vector.load %arg1[%c0_8, %c2, %c0_9, %c0_10, %c0_11] : memref<1x4x9x9x16xbf16, #tpu.memory_space<vmem>>, vector<1x1x9x9x16xbf16>
    %7 = vector.shape_cast %6 : vector<1x1x9x9x16xbf16> to vector<9x9x16xbf16>
    %8 = arith.extf %7 : vector<9x9x16xbf16> to vector<9x9x16xf32>
    %c0_12 = arith.constant 0 : index
    %c3 = arith.constant 3 : index
    %c0_13 = arith.constant 0 : index
    %c0_14 = arith.constant 0 : index
    %c0_15 = arith.constant 0 : index
    %9 = vector.load %arg1[%c0_12, %c3, %c0_13, %c0_14, %c0_15] : memref<1x4x9x9x16xbf16, #tpu.memory_space<vmem>>, vector<1x1x9x9x16xbf16>
    %10 = vector.shape_cast %9 : vector<1x1x9x9x16xbf16> to vector<9x9x16xbf16>
    %11 = arith.extf %10 : vector<9x9x16xbf16> to vector<9x9x16xf32>
    %cst = arith.constant 0.000000e+00 : f32
    %12 = vector.broadcast %cst : f32 to vector<64x32xf32>
    %13 = vector.extract_strided_slice %2 {offsets = [0, 0, 0], sizes = [8, 8, 16], strides = [1, 1, 1]} : vector<9x9x16xf32> to vector<8x8x16xf32>
    %14 = vector.shape_cast %13 : vector<8x8x16xf32> to vector<64x16xf32>
    %15 = arith.truncf %14 : vector<64x16xf32> to vector<64x16xbf16>
    %c0_16 = arith.constant 0 : index
    %c0_17 = arith.constant 0 : index
    %c0_18 = arith.constant 0 : index
    %16 = vector.load %arg2[%c0_16, %c0_17, %c0_18] : memref<9x16x32xbf16, #tpu.memory_space<vmem>>, vector<1x16x32xbf16>
    %17 = vector.shape_cast %16 : vector<1x16x32xbf16> to vector<16x32xbf16>
    %cst_19 = arith.constant dense<0.000000e+00> : vector<64x32xf32>
    %18 = tpu.matmul %15, %17, %cst_19 {dimension_numbers = #tpu.dot_dimension_numbers<[1], [0], [0], [1], [0, 0, 1, 1], [], []>} : vector<64x16xbf16>, vector<16x32xbf16>, vector<64x32xf32> -> vector<64x32xf32>
    %19 = arith.addf %12, %18 : vector<64x32xf32>
    %20 = vector.extract_strided_slice %5 {offsets = [0, 0, 0], sizes = [8, 8, 16], strides = [1, 1, 1]} : vector<9x9x16xf32> to vector<8x8x16xf32>
    %21 = vector.shape_cast %20 : vector<8x8x16xf32> to vector<64x16xf32>
    %22 = arith.truncf %21 : vector<64x16xf32> to vector<64x16xbf16>
    %c1_20 = arith.constant 1 : index
    %c0_21 = arith.constant 0 : index
    %c0_22 = arith.constant 0 : index
    %23 = vector.load %arg2[%c1_20, %c0_21, %c0_22] : memref<9x16x32xbf16, #tpu.memory_space<vmem>>, vector<1x16x32xbf16>
    %24 = vector.shape_cast %23 : vector<1x16x32xbf16> to vector<16x32xbf16>
    %cst_23 = arith.constant dense<0.000000e+00> : vector<64x32xf32>
    %25 = tpu.matmul %22, %24, %cst_23 {dimension_numbers = #tpu.dot_dimension_numbers<[1], [0], [0], [1], [0, 0, 1, 1], [], []>} : vector<64x16xbf16>, vector<16x32xbf16>, vector<64x32xf32> -> vector<64x32xf32>
    %26 = arith.addf %19, %25 : vector<64x32xf32>
    %27 = vector.extract_strided_slice %2 {offsets = [0, 1, 0], sizes = [8, 8, 16], strides = [1, 1, 1]} : vector<9x9x16xf32> to vector<8x8x16xf32>
    %28 = vector.shape_cast %27 : vector<8x8x16xf32> to vector<64x16xf32>
    %29 = arith.truncf %28 : vector<64x16xf32> to vector<64x16xbf16>
    %c2_24 = arith.constant 2 : index
    %c0_25 = arith.constant 0 : index
    %c0_26 = arith.constant 0 : index
    %30 = vector.load %arg2[%c2_24, %c0_25, %c0_26] : memref<9x16x32xbf16, #tpu.memory_space<vmem>>, vector<1x16x32xbf16>
    %31 = vector.shape_cast %30 : vector<1x16x32xbf16> to vector<16x32xbf16>
    %cst_27 = arith.constant dense<0.000000e+00> : vector<64x32xf32>
    %32 = tpu.matmul %29, %31, %cst_27 {dimension_numbers = #tpu.dot_dimension_numbers<[1], [0], [0], [1], [0, 0, 1, 1], [], []>} : vector<64x16xbf16>, vector<16x32xbf16>, vector<64x32xf32> -> vector<64x32xf32>
    %33 = arith.addf %26, %32 : vector<64x32xf32>
    %34 = vector.extract_strided_slice %8 {offsets = [0, 0, 0], sizes = [8, 8, 16], strides = [1, 1, 1]} : vector<9x9x16xf32> to vector<8x8x16xf32>
    %35 = vector.shape_cast %34 : vector<8x8x16xf32> to vector<64x16xf32>
    %36 = arith.truncf %35 : vector<64x16xf32> to vector<64x16xbf16>
    %c3_28 = arith.constant 3 : index
    %c0_29 = arith.constant 0 : index
    %c0_30 = arith.constant 0 : index
    %37 = vector.load %arg2[%c3_28, %c0_29, %c0_30] : memref<9x16x32xbf16, #tpu.memory_space<vmem>>, vector<1x16x32xbf16>
    %38 = vector.shape_cast %37 : vector<1x16x32xbf16> to vector<16x32xbf16>
    %cst_31 = arith.constant dense<0.000000e+00> : vector<64x32xf32>
    %39 = tpu.matmul %36, %38, %cst_31 {dimension_numbers = #tpu.dot_dimension_numbers<[1], [0], [0], [1], [0, 0, 1, 1], [], []>} : vector<64x16xbf16>, vector<16x32xbf16>, vector<64x32xf32> -> vector<64x32xf32>
    %40 = arith.addf %33, %39 : vector<64x32xf32>
    %41 = vector.extract_strided_slice %11 {offsets = [0, 0, 0], sizes = [8, 8, 16], strides = [1, 1, 1]} : vector<9x9x16xf32> to vector<8x8x16xf32>
    %42 = vector.shape_cast %41 : vector<8x8x16xf32> to vector<64x16xf32>
    %43 = arith.truncf %42 : vector<64x16xf32> to vector<64x16xbf16>
    %c4 = arith.constant 4 : index
    %c0_32 = arith.constant 0 : index
    %c0_33 = arith.constant 0 : index
    %44 = vector.load %arg2[%c4, %c0_32, %c0_33] : memref<9x16x32xbf16, #tpu.memory_space<vmem>>, vector<1x16x32xbf16>
    %45 = vector.shape_cast %44 : vector<1x16x32xbf16> to vector<16x32xbf16>
    %cst_34 = arith.constant dense<0.000000e+00> : vector<64x32xf32>
    %46 = tpu.matmul %43, %45, %cst_34 {dimension_numbers = #tpu.dot_dimension_numbers<[1], [0], [0], [1], [0, 0, 1, 1], [], []>} : vector<64x16xbf16>, vector<16x32xbf16>, vector<64x32xf32> -> vector<64x32xf32>
    %47 = arith.addf %40, %46 : vector<64x32xf32>
    %48 = vector.extract_strided_slice %8 {offsets = [0, 1, 0], sizes = [8, 8, 16], strides = [1, 1, 1]} : vector<9x9x16xf32> to vector<8x8x16xf32>
    %49 = vector.shape_cast %48 : vector<8x8x16xf32> to vector<64x16xf32>
    %50 = arith.truncf %49 : vector<64x16xf32> to vector<64x16xbf16>
    %c5 = arith.constant 5 : index
    %c0_35 = arith.constant 0 : index
    %c0_36 = arith.constant 0 : index
    %51 = vector.load %arg2[%c5, %c0_35, %c0_36] : memref<9x16x32xbf16, #tpu.memory_space<vmem>>, vector<1x16x32xbf16>
    %52 = vector.shape_cast %51 : vector<1x16x32xbf16> to vector<16x32xbf16>
    %cst_37 = arith.constant dense<0.000000e+00> : vector<64x32xf32>
    %53 = tpu.matmul %50, %52, %cst_37 {dimension_numbers = #tpu.dot_dimension_numbers<[1], [0], [0], [1], [0, 0, 1, 1], [], []>} : vector<64x16xbf16>, vector<16x32xbf16>, vector<64x32xf32> -> vector<64x32xf32>
    %54 = arith.addf %47, %53 : vector<64x32xf32>
    %55 = vector.extract_strided_slice %2 {offsets = [1, 0, 0], sizes = [8, 8, 16], strides = [1, 1, 1]} : vector<9x9x16xf32> to vector<8x8x16xf32>
    %56 = vector.shape_cast %55 : vector<8x8x16xf32> to vector<64x16xf32>
    %57 = arith.truncf %56 : vector<64x16xf32> to vector<64x16xbf16>
    %c6 = arith.constant 6 : index
    %c0_38 = arith.constant 0 : index
    %c0_39 = arith.constant 0 : index
    %58 = vector.load %arg2[%c6, %c0_38, %c0_39] : memref<9x16x32xbf16, #tpu.memory_space<vmem>>, vector<1x16x32xbf16>
    %59 = vector.shape_cast %58 : vector<1x16x32xbf16> to vector<16x32xbf16>
    %cst_40 = arith.constant dense<0.000000e+00> : vector<64x32xf32>
    %60 = tpu.matmul %57, %59, %cst_40 {dimension_numbers = #tpu.dot_dimension_numbers<[1], [0], [0], [1], [0, 0, 1, 1], [], []>} : vector<64x16xbf16>, vector<16x32xbf16>, vector<64x32xf32> -> vector<64x32xf32>
    %61 = arith.addf %54, %60 : vector<64x32xf32>
    %62 = vector.extract_strided_slice %5 {offsets = [1, 0, 0], sizes = [8, 8, 16], strides = [1, 1, 1]} : vector<9x9x16xf32> to vector<8x8x16xf32>
    %63 = vector.shape_cast %62 : vector<8x8x16xf32> to vector<64x16xf32>
    %64 = arith.truncf %63 : vector<64x16xf32> to vector<64x16xbf16>
    %c7 = arith.constant 7 : index
    %c0_41 = arith.constant 0 : index
    %c0_42 = arith.constant 0 : index
    %65 = vector.load %arg2[%c7, %c0_41, %c0_42] : memref<9x16x32xbf16, #tpu.memory_space<vmem>>, vector<1x16x32xbf16>
    %66 = vector.shape_cast %65 : vector<1x16x32xbf16> to vector<16x32xbf16>
    %cst_43 = arith.constant dense<0.000000e+00> : vector<64x32xf32>
    %67 = tpu.matmul %64, %66, %cst_43 {dimension_numbers = #tpu.dot_dimension_numbers<[1], [0], [0], [1], [0, 0, 1, 1], [], []>} : vector<64x16xbf16>, vector<16x32xbf16>, vector<64x32xf32> -> vector<64x32xf32>
    %68 = arith.addf %61, %67 : vector<64x32xf32>
    %69 = vector.extract_strided_slice %2 {offsets = [1, 1, 0], sizes = [8, 8, 16], strides = [1, 1, 1]} : vector<9x9x16xf32> to vector<8x8x16xf32>
    %70 = vector.shape_cast %69 : vector<8x8x16xf32> to vector<64x16xf32>
    %71 = arith.truncf %70 : vector<64x16xf32> to vector<64x16xbf16>
    %c8 = arith.constant 8 : index
    %c0_44 = arith.constant 0 : index
    %c0_45 = arith.constant 0 : index
    %72 = vector.load %arg2[%c8, %c0_44, %c0_45] : memref<9x16x32xbf16, #tpu.memory_space<vmem>>, vector<1x16x32xbf16>
    %73 = vector.shape_cast %72 : vector<1x16x32xbf16> to vector<16x32xbf16>
    %cst_46 = arith.constant dense<0.000000e+00> : vector<64x32xf32>
    %74 = tpu.matmul %71, %73, %cst_46 {dimension_numbers = #tpu.dot_dimension_numbers<[1], [0], [0], [1], [0, 0, 1, 1], [], []>} : vector<64x16xbf16>, vector<16x32xbf16>, vector<64x32xf32> -> vector<64x32xf32>
    %75 = arith.addf %68, %74 : vector<64x32xf32>
    %c0_47 = arith.constant 0 : index
    %c0_48 = arith.constant 0 : index
    %76 = vector.load %arg3[%c0_47, %c0_48] : memref<1x32xf32, #tpu.memory_space<vmem>>, vector<1x32xf32>
    %77 = vector.broadcast %76 : vector<1x32xf32> to vector<64x32xf32>
    %78 = arith.mulf %75, %77 : vector<64x32xf32>
    %c0_49 = arith.constant 0 : index
    %c0_50 = arith.constant 0 : index
    %79 = vector.load %arg4[%c0_49, %c0_50] : memref<1x32xf32, #tpu.memory_space<vmem>>, vector<1x32xf32>
    %80 = vector.broadcast %79 : vector<1x32xf32> to vector<64x32xf32>
    %81 = arith.addf %78, %80 : vector<64x32xf32>
    %cst_51 = arith.constant 0.000000e+00 : f32
    %82 = vector.broadcast %cst_51 : f32 to vector<64x32xf32>
    %83 = arith.maximumf %81, %82 : vector<64x32xf32>
    %84 = arith.truncf %83 : vector<64x32xf32> to vector<64x32xbf16>
    %c0_52 = arith.constant 0 : index
    %c0_53 = arith.constant 0 : index
    %c0_54 = arith.constant 0 : index
    %85 = vector.load %arg5[%c0_52, %c0_53, %c0_54] : memref<1x64x32xbf16, #tpu.memory_space<vmem>>, vector<1x64x32xbf16>
    %86 = vector.shape_cast %85 : vector<1x64x32xbf16> to vector<64x32xbf16>
    %87 = vector.shape_cast %84 : vector<64x32xbf16> to vector<1x64x32xbf16>
    tpu.vector_store %arg5[%c0_52, %c0_53, %c0_54], %87 {strides = array<i32>} : memref<1x64x32xbf16, #tpu.memory_space<vmem>>, vector<1x64x32xbf16>,
    return
  }
  func.func @transform_0(%arg0: i32) -> (i32, i32, i32, i32, i32) {
    %c0_i32 = arith.constant 0 : i32
    %c0_i32_0 = arith.constant 0 : i32
    %c0_i32_1 = arith.constant 0 : i32
    %c0_i32_2 = arith.constant 0 : i32
    %c0_i32_3 = arith.constant 0 : i32
    return %arg0, %c0_i32, %c0_i32_0, %c0_i32_1, %c0_i32_2 : i32, i32, i32, i32, i32
  }
  func.func @transform_1(%arg0: i32) -> (i32, i32, i32) {
    %c0_i32 = arith.constant 0 : i32
    %c0_i32_0 = arith.constant 0 : i32
    %c0_i32_1 = arith.constant 0 : i32
    %c0_i32_2 = arith.constant 0 : i32
    return %c0_i32, %c0_i32_0, %c0_i32_1 : i32, i32, i32
  }
  func.func @transform_2(%arg0: i32) -> (i32, i32) {
    %c0_i32 = arith.constant 0 : i32
    %c0_i32_0 = arith.constant 0 : i32
    %c0_i32_1 = arith.constant 0 : i32
    return %c0_i32, %c0_i32_0 : i32, i32
  }
  func.func @transform_3(%arg0: i32) -> (i32, i32) {
    %c0_i32 = arith.constant 0 : i32
    %c0_i32_0 = arith.constant 0 : i32
    %c0_i32_1 = arith.constant 0 : i32
    return %c0_i32, %c0_i32_0 : i32, i32
  }
  func.func @transform_4(%arg0: i32) -> (i32, i32, i32) {
    %c0_i32 = arith.constant 0 : i32
    %c0_i32_0 = arith.constant 0 : i32
    %c0_i32_1 = arith.constant 0 : i32
    return %arg0, %c0_i32, %c0_i32_0 : i32, i32, i32
  }
}

module attributes {stable_mosaic.version = 11 : i64} {
  func.func @_conv3x3_bn_kernel(%arg0: i32, %arg1: memref<1x1x10x10x32xbf16, #tpu.memory_space<vmem>>, %arg2: memref<9x32x32xbf16, #tpu.memory_space<vmem>>, %arg3: memref<1x32xf32, #tpu.memory_space<vmem>>, %arg4: memref<1x32xf32, #tpu.memory_space<vmem>>, %arg5: memref<1x64x32xbf16, #tpu.memory_space<vmem>>, %arg6: memref<1x1x32xf32, #tpu.memory_space<vmem>>) attributes {dimension_semantics = [#tpu.dimension_semantics<parallel>], iteration_bounds = array<i64: 2>, scalar_prefetch = 0 : i64, scratch_operands = 0 : i64, tpu.core_type = #tpu.core_type<tc>, window_params = [{transform_indices = @transform_0, window_bounds = array<i64: 1, 1, 10, 10, 32>}, {pipeline_mode = #tpu.pipeline_mode<synchronous>, transform_indices = @transform_1, window_bounds = array<i64: 9, 32, 32>}, {pipeline_mode = #tpu.pipeline_mode<synchronous>, transform_indices = @transform_2, window_bounds = array<i64: 1, 32>}, {pipeline_mode = #tpu.pipeline_mode<synchronous>, transform_indices = @transform_3, window_bounds = array<i64: 1, 32>}, {transform_indices = @transform_4, window_bounds = array<i64: 1, 64, 32>}, {transform_indices = @transform_5, window_bounds = array<i64: 1, 1, 32>}]} {
    %c0 = arith.constant 0 : index
    %c0_0 = arith.constant 0 : index
    %c0_1 = arith.constant 0 : index
    %c0_2 = arith.constant 0 : index
    %c0_3 = arith.constant 0 : index
    %0 = vector.load %arg1[%c0, %c0_0, %c0_1, %c0_2, %c0_3] : memref<1x1x10x10x32xbf16, #tpu.memory_space<vmem>>, vector<1x1x10x10x32xbf16>
    %1 = vector.shape_cast %0 : vector<1x1x10x10x32xbf16> to vector<10x10x32xbf16>
    %2 = arith.extf %1 : vector<10x10x32xbf16> to vector<10x10x32xf32>
    %cst = arith.constant 0.000000e+00 : f32
    %3 = vector.broadcast %cst : f32 to vector<64x32xf32>
    %4 = vector.extract_strided_slice %2 {offsets = [0, 0, 0], sizes = [8, 8, 32], strides = [1, 1, 1]} : vector<10x10x32xf32> to vector<8x8x32xf32>
    %5 = vector.shape_cast %4 : vector<8x8x32xf32> to vector<64x32xf32>
    %6 = arith.truncf %5 : vector<64x32xf32> to vector<64x32xbf16>
    %c0_4 = arith.constant 0 : index
    %c0_5 = arith.constant 0 : index
    %c0_6 = arith.constant 0 : index
    %7 = vector.load %arg2[%c0_4, %c0_5, %c0_6] : memref<9x32x32xbf16, #tpu.memory_space<vmem>>, vector<1x32x32xbf16>
    %8 = vector.shape_cast %7 : vector<1x32x32xbf16> to vector<32x32xbf16>
    %cst_7 = arith.constant dense<0.000000e+00> : vector<64x32xf32>
    %9 = tpu.matmul %6, %8, %cst_7 {dimension_numbers = #tpu.dot_dimension_numbers<[1], [0], [0], [1], [0, 0, 1, 1], [], []>} : vector<64x32xbf16>, vector<32x32xbf16>, vector<64x32xf32> -> vector<64x32xf32>
    %10 = arith.addf %3, %9 : vector<64x32xf32>
    %11 = vector.extract_strided_slice %2 {offsets = [0, 1, 0], sizes = [8, 8, 32], strides = [1, 1, 1]} : vector<10x10x32xf32> to vector<8x8x32xf32>
    %12 = vector.shape_cast %11 : vector<8x8x32xf32> to vector<64x32xf32>
    %13 = arith.truncf %12 : vector<64x32xf32> to vector<64x32xbf16>
    %c1 = arith.constant 1 : index
    %c0_8 = arith.constant 0 : index
    %c0_9 = arith.constant 0 : index
    %14 = vector.load %arg2[%c1, %c0_8, %c0_9] : memref<9x32x32xbf16, #tpu.memory_space<vmem>>, vector<1x32x32xbf16>
    %15 = vector.shape_cast %14 : vector<1x32x32xbf16> to vector<32x32xbf16>
    %cst_10 = arith.constant dense<0.000000e+00> : vector<64x32xf32>
    %16 = tpu.matmul %13, %15, %cst_10 {dimension_numbers = #tpu.dot_dimension_numbers<[1], [0], [0], [1], [0, 0, 1, 1], [], []>} : vector<64x32xbf16>, vector<32x32xbf16>, vector<64x32xf32> -> vector<64x32xf32>
    %17 = arith.addf %10, %16 : vector<64x32xf32>
    %18 = vector.extract_strided_slice %2 {offsets = [0, 2, 0], sizes = [8, 8, 32], strides = [1, 1, 1]} : vector<10x10x32xf32> to vector<8x8x32xf32>
    %19 = vector.shape_cast %18 : vector<8x8x32xf32> to vector<64x32xf32>
    %20 = arith.truncf %19 : vector<64x32xf32> to vector<64x32xbf16>
    %c2 = arith.constant 2 : index
    %c0_11 = arith.constant 0 : index
    %c0_12 = arith.constant 0 : index
    %21 = vector.load %arg2[%c2, %c0_11, %c0_12] : memref<9x32x32xbf16, #tpu.memory_space<vmem>>, vector<1x32x32xbf16>
    %22 = vector.shape_cast %21 : vector<1x32x32xbf16> to vector<32x32xbf16>
    %cst_13 = arith.constant dense<0.000000e+00> : vector<64x32xf32>
    %23 = tpu.matmul %20, %22, %cst_13 {dimension_numbers = #tpu.dot_dimension_numbers<[1], [0], [0], [1], [0, 0, 1, 1], [], []>} : vector<64x32xbf16>, vector<32x32xbf16>, vector<64x32xf32> -> vector<64x32xf32>
    %24 = arith.addf %17, %23 : vector<64x32xf32>
    %25 = vector.extract_strided_slice %2 {offsets = [1, 0, 0], sizes = [8, 8, 32], strides = [1, 1, 1]} : vector<10x10x32xf32> to vector<8x8x32xf32>
    %26 = vector.shape_cast %25 : vector<8x8x32xf32> to vector<64x32xf32>
    %27 = arith.truncf %26 : vector<64x32xf32> to vector<64x32xbf16>
    %c3 = arith.constant 3 : index
    %c0_14 = arith.constant 0 : index
    %c0_15 = arith.constant 0 : index
    %28 = vector.load %arg2[%c3, %c0_14, %c0_15] : memref<9x32x32xbf16, #tpu.memory_space<vmem>>, vector<1x32x32xbf16>
    %29 = vector.shape_cast %28 : vector<1x32x32xbf16> to vector<32x32xbf16>
    %cst_16 = arith.constant dense<0.000000e+00> : vector<64x32xf32>
    %30 = tpu.matmul %27, %29, %cst_16 {dimension_numbers = #tpu.dot_dimension_numbers<[1], [0], [0], [1], [0, 0, 1, 1], [], []>} : vector<64x32xbf16>, vector<32x32xbf16>, vector<64x32xf32> -> vector<64x32xf32>
    %31 = arith.addf %24, %30 : vector<64x32xf32>
    %32 = vector.extract_strided_slice %2 {offsets = [1, 1, 0], sizes = [8, 8, 32], strides = [1, 1, 1]} : vector<10x10x32xf32> to vector<8x8x32xf32>
    %33 = vector.shape_cast %32 : vector<8x8x32xf32> to vector<64x32xf32>
    %34 = arith.truncf %33 : vector<64x32xf32> to vector<64x32xbf16>
    %c4 = arith.constant 4 : index
    %c0_17 = arith.constant 0 : index
    %c0_18 = arith.constant 0 : index
    %35 = vector.load %arg2[%c4, %c0_17, %c0_18] : memref<9x32x32xbf16, #tpu.memory_space<vmem>>, vector<1x32x32xbf16>
    %36 = vector.shape_cast %35 : vector<1x32x32xbf16> to vector<32x32xbf16>
    %cst_19 = arith.constant dense<0.000000e+00> : vector<64x32xf32>
    %37 = tpu.matmul %34, %36, %cst_19 {dimension_numbers = #tpu.dot_dimension_numbers<[1], [0], [0], [1], [0, 0, 1, 1], [], []>} : vector<64x32xbf16>, vector<32x32xbf16>, vector<64x32xf32> -> vector<64x32xf32>
    %38 = arith.addf %31, %37 : vector<64x32xf32>
    %39 = vector.extract_strided_slice %2 {offsets = [1, 2, 0], sizes = [8, 8, 32], strides = [1, 1, 1]} : vector<10x10x32xf32> to vector<8x8x32xf32>
    %40 = vector.shape_cast %39 : vector<8x8x32xf32> to vector<64x32xf32>
    %41 = arith.truncf %40 : vector<64x32xf32> to vector<64x32xbf16>
    %c5 = arith.constant 5 : index
    %c0_20 = arith.constant 0 : index
    %c0_21 = arith.constant 0 : index
    %42 = vector.load %arg2[%c5, %c0_20, %c0_21] : memref<9x32x32xbf16, #tpu.memory_space<vmem>>, vector<1x32x32xbf16>
    %43 = vector.shape_cast %42 : vector<1x32x32xbf16> to vector<32x32xbf16>
    %cst_22 = arith.constant dense<0.000000e+00> : vector<64x32xf32>
    %44 = tpu.matmul %41, %43, %cst_22 {dimension_numbers = #tpu.dot_dimension_numbers<[1], [0], [0], [1], [0, 0, 1, 1], [], []>} : vector<64x32xbf16>, vector<32x32xbf16>, vector<64x32xf32> -> vector<64x32xf32>
    %45 = arith.addf %38, %44 : vector<64x32xf32>
    %46 = vector.extract_strided_slice %2 {offsets = [2, 0, 0], sizes = [8, 8, 32], strides = [1, 1, 1]} : vector<10x10x32xf32> to vector<8x8x32xf32>
    %47 = vector.shape_cast %46 : vector<8x8x32xf32> to vector<64x32xf32>
    %48 = arith.truncf %47 : vector<64x32xf32> to vector<64x32xbf16>
    %c6 = arith.constant 6 : index
    %c0_23 = arith.constant 0 : index
    %c0_24 = arith.constant 0 : index
    %49 = vector.load %arg2[%c6, %c0_23, %c0_24] : memref<9x32x32xbf16, #tpu.memory_space<vmem>>, vector<1x32x32xbf16>
    %50 = vector.shape_cast %49 : vector<1x32x32xbf16> to vector<32x32xbf16>
    %cst_25 = arith.constant dense<0.000000e+00> : vector<64x32xf32>
    %51 = tpu.matmul %48, %50, %cst_25 {dimension_numbers = #tpu.dot_dimension_numbers<[1], [0], [0], [1], [0, 0, 1, 1], [], []>} : vector<64x32xbf16>, vector<32x32xbf16>, vector<64x32xf32> -> vector<64x32xf32>
    %52 = arith.addf %45, %51 : vector<64x32xf32>
    %53 = vector.extract_strided_slice %2 {offsets = [2, 1, 0], sizes = [8, 8, 32], strides = [1, 1, 1]} : vector<10x10x32xf32> to vector<8x8x32xf32>
    %54 = vector.shape_cast %53 : vector<8x8x32xf32> to vector<64x32xf32>
    %55 = arith.truncf %54 : vector<64x32xf32> to vector<64x32xbf16>
    %c7 = arith.constant 7 : index
    %c0_26 = arith.constant 0 : index
    %c0_27 = arith.constant 0 : index
    %56 = vector.load %arg2[%c7, %c0_26, %c0_27] : memref<9x32x32xbf16, #tpu.memory_space<vmem>>, vector<1x32x32xbf16>
    %57 = vector.shape_cast %56 : vector<1x32x32xbf16> to vector<32x32xbf16>
    %cst_28 = arith.constant dense<0.000000e+00> : vector<64x32xf32>
    %58 = tpu.matmul %55, %57, %cst_28 {dimension_numbers = #tpu.dot_dimension_numbers<[1], [0], [0], [1], [0, 0, 1, 1], [], []>} : vector<64x32xbf16>, vector<32x32xbf16>, vector<64x32xf32> -> vector<64x32xf32>
    %59 = arith.addf %52, %58 : vector<64x32xf32>
    %60 = vector.extract_strided_slice %2 {offsets = [2, 2, 0], sizes = [8, 8, 32], strides = [1, 1, 1]} : vector<10x10x32xf32> to vector<8x8x32xf32>
    %61 = vector.shape_cast %60 : vector<8x8x32xf32> to vector<64x32xf32>
    %62 = arith.truncf %61 : vector<64x32xf32> to vector<64x32xbf16>
    %c8 = arith.constant 8 : index
    %c0_29 = arith.constant 0 : index
    %c0_30 = arith.constant 0 : index
    %63 = vector.load %arg2[%c8, %c0_29, %c0_30] : memref<9x32x32xbf16, #tpu.memory_space<vmem>>, vector<1x32x32xbf16>
    %64 = vector.shape_cast %63 : vector<1x32x32xbf16> to vector<32x32xbf16>
    %cst_31 = arith.constant dense<0.000000e+00> : vector<64x32xf32>
    %65 = tpu.matmul %62, %64, %cst_31 {dimension_numbers = #tpu.dot_dimension_numbers<[1], [0], [0], [1], [0, 0, 1, 1], [], []>} : vector<64x32xbf16>, vector<32x32xbf16>, vector<64x32xf32> -> vector<64x32xf32>
    %66 = arith.addf %59, %65 : vector<64x32xf32>
    %c0_32 = arith.constant 0 : index
    %c0_33 = arith.constant 0 : index
    %67 = vector.load %arg3[%c0_32, %c0_33] : memref<1x32xf32, #tpu.memory_space<vmem>>, vector<1x32xf32>
    %68 = vector.broadcast %67 : vector<1x32xf32> to vector<64x32xf32>
    %69 = arith.mulf %66, %68 : vector<64x32xf32>
    %c0_34 = arith.constant 0 : index
    %c0_35 = arith.constant 0 : index
    %70 = vector.load %arg4[%c0_34, %c0_35] : memref<1x32xf32, #tpu.memory_space<vmem>>, vector<1x32xf32>
    %71 = vector.broadcast %70 : vector<1x32xf32> to vector<64x32xf32>
    %72 = arith.addf %69, %71 : vector<64x32xf32>
    %cst_36 = arith.constant dense<0.000000e+00> : vector<32xf32>
    %73 = vector.multi_reduction <add>, %72, %cst_36 [0] : vector<64x32xf32> to vector<32xf32>
    %74 = vector.shape_cast %73 : vector<32xf32> to vector<1x32xf32>
    %cst_37 = arith.constant 6.400000e+01 : f32
    %75 = vector.broadcast %cst_37 : f32 to vector<1x32xf32>
    %76 = arith.divf %74, %75 : vector<1x32xf32>
    %c0_38 = arith.constant 0 : index
    %c0_39 = arith.constant 0 : index
    %c0_40 = arith.constant 0 : index
    %77 = vector.load %arg6[%c0_38, %c0_39, %c0_40] : memref<1x1x32xf32, #tpu.memory_space<vmem>>, vector<1x1x32xf32>
    %78 = vector.shape_cast %77 : vector<1x1x32xf32> to vector<1x32xf32>
    %79 = vector.shape_cast %76 : vector<1x32xf32> to vector<1x1x32xf32>
    tpu.vector_store %arg6[%c0_38, %c0_39, %c0_40], %79 {strides = array<i32>} : memref<1x1x32xf32, #tpu.memory_space<vmem>>, vector<1x1x32xf32>,
    %80 = arith.truncf %72 : vector<64x32xf32> to vector<64x32xbf16>
    %c0_41 = arith.constant 0 : index
    %c0_42 = arith.constant 0 : index
    %c0_43 = arith.constant 0 : index
    %81 = vector.load %arg5[%c0_41, %c0_42, %c0_43] : memref<1x64x32xbf16, #tpu.memory_space<vmem>>, vector<1x64x32xbf16>
    %82 = vector.shape_cast %81 : vector<1x64x32xbf16> to vector<64x32xbf16>
    %83 = vector.shape_cast %80 : vector<64x32xbf16> to vector<1x64x32xbf16>
    tpu.vector_store %arg5[%c0_41, %c0_42, %c0_43], %83 {strides = array<i32>} : memref<1x64x32xbf16, #tpu.memory_space<vmem>>, vector<1x64x32xbf16>,
    return
  }
  func.func @transform_0(%arg0: i32) -> (i32, i32, i32, i32, i32) {
    %c0_i32 = arith.constant 0 : i32
    %c0_i32_0 = arith.constant 0 : i32
    %c0_i32_1 = arith.constant 0 : i32
    %c0_i32_2 = arith.constant 0 : i32
    %c0_i32_3 = arith.constant 0 : i32
    return %arg0, %c0_i32, %c0_i32_0, %c0_i32_1, %c0_i32_2 : i32, i32, i32, i32, i32
  }
  func.func @transform_1(%arg0: i32) -> (i32, i32, i32) {
    %c0_i32 = arith.constant 0 : i32
    %c0_i32_0 = arith.constant 0 : i32
    %c0_i32_1 = arith.constant 0 : i32
    %c0_i32_2 = arith.constant 0 : i32
    return %c0_i32, %c0_i32_0, %c0_i32_1 : i32, i32, i32
  }
  func.func @transform_2(%arg0: i32) -> (i32, i32) {
    %c0_i32 = arith.constant 0 : i32
    %c0_i32_0 = arith.constant 0 : i32
    %c0_i32_1 = arith.constant 0 : i32
    return %c0_i32, %c0_i32_0 : i32, i32
  }
  func.func @transform_3(%arg0: i32) -> (i32, i32) {
    %c0_i32 = arith.constant 0 : i32
    %c0_i32_0 = arith.constant 0 : i32
    %c0_i32_1 = arith.constant 0 : i32
    return %c0_i32, %c0_i32_0 : i32, i32
  }
  func.func @transform_4(%arg0: i32) -> (i32, i32, i32) {
    %c0_i32 = arith.constant 0 : i32
    %c0_i32_0 = arith.constant 0 : i32
    %c0_i32_1 = arith.constant 0 : i32
    return %arg0, %c0_i32, %c0_i32_0 : i32, i32, i32
  }
  func.func @transform_5(%arg0: i32) -> (i32, i32, i32) {
    %c0_i32 = arith.constant 0 : i32
    %c0_i32_0 = arith.constant 0 : i32
    %c0_i32_1 = arith.constant 0 : i32
    return %arg0, %c0_i32, %c0_i32_0 : i32, i32, i32
  }
}

module attributes {stable_mosaic.version = 11 : i64} {
  func.func @_gate_residual_kernel(%arg0: i32, %arg1: memref<1x16x128xbf16, #tpu.memory_space<vmem>>, %arg2: memref<1x16x128xf32, #tpu.memory_space<vmem>>, %arg3: memref<1x1x128xf32, #tpu.memory_space<vmem>>, %arg4: memref<1x16x128xf32, #tpu.memory_space<vmem>>) attributes {dimension_semantics = [#tpu.dimension_semantics<parallel>], iteration_bounds = array<i64: 2>, scalar_prefetch = 0 : i64, scratch_operands = 0 : i64, tpu.core_type = #tpu.core_type<tc>, window_params = [{transform_indices = @transform_0, window_bounds = array<i64: 1, 16, 128>}, {transform_indices = @transform_1, window_bounds = array<i64: 1, 16, 128>}, {transform_indices = @transform_2, window_bounds = array<i64: 1, 1, 128>}, {transform_indices = @transform_3, window_bounds = array<i64: 1, 16, 128>}]} {
    %c0 = arith.constant 0 : index
    %c0_0 = arith.constant 0 : index
    %c0_1 = arith.constant 0 : index
    %0 = vector.load %arg1[%c0, %c0_0, %c0_1] : memref<1x16x128xbf16, #tpu.memory_space<vmem>>, vector<1x16x128xbf16>
    %1 = vector.shape_cast %0 : vector<1x16x128xbf16> to vector<16x128xbf16>
    %2 = arith.extf %1 : vector<16x128xbf16> to vector<16x128xf32>
    %c0_2 = arith.constant 0 : index
    %c0_3 = arith.constant 0 : index
    %c0_4 = arith.constant 0 : index
    %3 = vector.load %arg2[%c0_2, %c0_3, %c0_4] : memref<1x16x128xf32, #tpu.memory_space<vmem>>, vector<1x16x128xf32>
    %4 = vector.shape_cast %3 : vector<1x16x128xf32> to vector<16x128xf32>
    %c0_5 = arith.constant 0 : index
    %c0_6 = arith.constant 0 : index
    %c0_7 = arith.constant 0 : index
    %5 = vector.load %arg3[%c0_5, %c0_6, %c0_7] : memref<1x1x128xf32, #tpu.memory_space<vmem>>, vector<1x1x128xf32>
    %6 = vector.shape_cast %5 : vector<1x1x128xf32> to vector<1x128xf32>
    %7 = vector.broadcast %6 : vector<1x128xf32> to vector<16x128xf32>
    %8 = arith.mulf %2, %7 : vector<16x128xf32>
    %9 = arith.addf %8, %4 : vector<16x128xf32>
    %cst = arith.constant 0.000000e+00 : f32
    %10 = vector.broadcast %cst : f32 to vector<16x128xf32>
    %11 = arith.maximumf %9, %10 : vector<16x128xf32>
    %c0_8 = arith.constant 0 : index
    %c0_9 = arith.constant 0 : index
    %c0_10 = arith.constant 0 : index
    %12 = vector.load %arg4[%c0_8, %c0_9, %c0_10] : memref<1x16x128xf32, #tpu.memory_space<vmem>>, vector<1x16x128xf32>
    %13 = vector.shape_cast %12 : vector<1x16x128xf32> to vector<16x128xf32>
    %14 = vector.shape_cast %11 : vector<16x128xf32> to vector<1x16x128xf32>
    tpu.vector_store %arg4[%c0_8, %c0_9, %c0_10], %14 {strides = array<i32>} : memref<1x16x128xf32, #tpu.memory_space<vmem>>, vector<1x16x128xf32>,
    return
  }
  func.func @transform_0(%arg0: i32) -> (i32, i32, i32) {
    %c0_i32 = arith.constant 0 : i32
    %c0_i32_0 = arith.constant 0 : i32
    %c0_i32_1 = arith.constant 0 : i32
    return %arg0, %c0_i32, %c0_i32_0 : i32, i32, i32
  }
  func.func @transform_1(%arg0: i32) -> (i32, i32, i32) {
    %c0_i32 = arith.constant 0 : i32
    %c0_i32_0 = arith.constant 0 : i32
    %c0_i32_1 = arith.constant 0 : i32
    return %arg0, %c0_i32, %c0_i32_0 : i32, i32, i32
  }
  func.func @transform_2(%arg0: i32) -> (i32, i32, i32) {
    %c0_i32 = arith.constant 0 : i32
    %c0_i32_0 = arith.constant 0 : i32
    %c0_i32_1 = arith.constant 0 : i32
    return %arg0, %c0_i32, %c0_i32_0 : i32, i32, i32
  }
  func.func @transform_3(%arg0: i32) -> (i32, i32, i32) {
    %c0_i32 = arith.constant 0 : i32
    %c0_i32_0 = arith.constant 0 : i32
    %c0_i32_1 = arith.constant 0 : i32
    return %arg0, %c0_i32, %c0_i32_0 : i32, i32, i32
  }
}

</mosaic_0001>

<llo_original>
// kernel: basic_block_forward.6
$region0: #{basic_block_forward.6}
  #allocation0 [shape = 'u32[]', space=smem, size = 0x4, offset = 0x4, fixed_abs, tag = 'smem constant byte address 0x4 - core index']
  #allocation1 [shape = 'u32[72,128]{1,0:T(1,128)}', space=vmem, size = 0x9000, scoped, tag = 'internal scratch']
  %s0 = inlined_call_operand.vmem [shape: bf16[128,16], index: 0, kind: input, shape index: {}]
  %s1 = inlined_call_operand.vmem [shape: bf16[16,32], index: 1, kind: input, shape index: {}]
  %s2 = inlined_call_operand.vmem [shape: f32[1,32], index: 2, kind: input, shape index: {}]
  %s3 = inlined_call_operand.vmem [shape: f32[1,32], index: 3, kind: input, shape index: {}]
  %s4 = inlined_call_operand.vmem [shape: f32[128,32], index: 4, kind: output, shape index: {}]
  %s5 = sld [smem:[#allocation0]]
  $region26: #{basic_block_forward.6} parent=0
    _
  %s7 = ssub.s32 1, %s5
  %s8 = scalar_select 0, %s7, %s5
  // Predicated region
  $region2: #{basic_block_forward.6} parent=0 // pred_check
    _
  $region3: #{basic_block_forward.6} parent=0 // pred_check_branch
    %10 = sbr.rel (0) target = $region5
  $region4: #{basic_block_forward.6} parent=0 // pred_region
    _
  $region5: #{basic_block_forward.6} parent=0 // pred_fallthru
    _
  // Predicated region
  $region6: #{basic_block_forward.6} parent=0 // pred_check
    _
  $region7: #{basic_block_forward.6} parent=0 // pred_check_branch
    %12 = sbr.rel (0) target = $region9
  $region8: #{basic_block_forward.6} parent=0 // pred_region
    _
  $region9: #{basic_block_forward.6} parent=0 // pred_fallthru
    _
  // Predicated region
  $region10: #{basic_block_forward.6} parent=0 // pred_check
    _
  $region11: #{basic_block_forward.6} parent=0 // pred_check_branch
    %14 = sbr.rel (0) target = $region13
  $region12: #{basic_block_forward.6} parent=0 // pred_region
    _
  $region13: #{basic_block_forward.6} parent=0 // pred_fallthru
    _
  // Predicated region
  $region14: #{basic_block_forward.6} parent=0 // pred_check
    _
  $region15: #{basic_block_forward.6} parent=0 // pred_check_branch
    %16 = sbr.rel (0) target = $region17
  $region16: #{basic_block_forward.6} parent=0 // pred_region
    _
  $region17: #{basic_block_forward.6} parent=0 // pred_fallthru
    _
  %v18 = vld [vmem:[%s0] sm:$0xf]
  %v19 = vld [vmem:[%s0 + $0x4] sm:$0xf]
  %v20 = vld [vmem:[%s0 + $0x8] sm:$0xf]
  %v21 = vld [vmem:[%s0 + $0xc] sm:$0xf]
  %v22 = vld [vmem:[%s0 + $0x10] sm:$0xf]
  %v23 = vld [vmem:[%s0 + $0x14] sm:$0xf]
  %v24 = vld [vmem:[%s0 + $0x18] sm:$0xf]
  %v25 = vld [vmem:[%s0 + $0x1c] sm:$0xf]
  %v26 = vld [vmem:[%s0 + $0x20] sm:$0xf]
  %v27 = vld [vmem:[%s0 + $0x24] sm:$0xf]
  %v28 = vld [vmem:[%s0 + $0x28] sm:$0xf]
  %v29 = vld [vmem:[%s0 + $0x2c] sm:$0xf]
  %v30 = vld [vmem:[%s0 + $0x30] sm:$0xf]
  %v31 = vld [vmem:[%s0 + $0x34] sm:$0xf]
  %v32 = vld [vmem:[%s0 + $0x38] sm:$0xf]
  %v33 = vld [vmem:[%s0 + $0x3c] sm:$0xf]
  %v34 = vld [vmem:[%s1] sm:$0xf]
  %v35 = vld [vmem:[%s1 + $0x4] sm:$0xf]
  %v52 = vunpack.c.l.b16 %v18
  %v53 = vunpack.c.l.b16 %v19
  %v54 = vunpack.c.l.b16 %v20
  %v55 = vunpack.c.l.b16 %v21
  %v56 = vunpack.c.l.b16 %v22
  %v57 = vunpack.c.l.b16 %v23
  %v58 = vunpack.c.l.b16 %v24
  %v59 = vunpack.c.l.b16 %v25
  %v60 = vunpack.c.l.b16 %v26
  %v61 = vunpack.c.l.b16 %v27
  %v62 = vunpack.c.l.b16 %v28
  %v63 = vunpack.c.l.b16 %v29
  %v64 = vunpack.c.l.b16 %v30
  %v65 = vunpack.c.l.b16 %v31
  %v66 = vunpack.c.l.b16 %v32
  %v67 = vunpack.c.l.b16 %v33
  %v68 = vpack.c.b16 %v53, %v52
  %v69 = vpack.c.b16 %v55, %v54
  %v70 = vpack.c.b16 %v57, %v56
  %v71 = vpack.c.b16 %v59, %v58
  %v72 = vpack.c.b16 %v61, %v60
  %v73 = vpack.c.b16 %v63, %v62
  %v74 = vpack.c.b16 %v65, %v64
  %v75 = vpack.c.b16 %v67, %v66
  %v78 = vunpack.c.l.b16 %v34
  %v79 = vunpack.c.l.b16 %v35
  %v80 = vpack.c.b16 %v79, %v78
  %vm82 = vcmask 130048
  %v84 = vsel %vm82, %v68, 0
  %v87 = vsel %vm82, %v69, 0
  %v90 = vsel %vm82, %v70, 0
  %v93 = vsel %vm82, %v71, 0
  %v96 = vsel %vm82, %v72, 0
  %v99 = vsel %vm82, %v73, 0
  %v102 = vsel %vm82, %v74, 0
  %v105 = vsel %vm82, %v75, 0
  %107 = vmatpush.bf16.msra.mxu0 0
  %108 = vmatpush.bf16.msra.mxu0 0
  %109 = vmatpush.bf16.msra.mxu0 0
  %110 = vmatpush.bf16.msra.mxu0 0
  %111 = vmatpush.bf16.msra.mxu0 0
  %112 = vmatpush.bf16.msra.mxu0 0
  %113 = vmatpush.bf16.msra.mxu0 0
  %114 = vmatpush.bf16.msra.mxu0 %v80
  %115 = vmatmul.bf16.gmra.mxu0 %v84
  %v116 = vpop.f32.mrf.mxu0
  %v117 = vadd.f32 0.0, %v116
  %v118 = vpop.f32.mrf.mxu0
  %v119 = vadd.f32 0.0, %v118
  %120 = vmatmul.bf16.gmra.mxu0 %v87
  %v121 = vpop.f32.mrf.mxu0
  %v122 = vadd.f32 0.0, %v121
  %v123 = vpop.f32.mrf.mxu0
  %v124 = vadd.f32 0.0, %v123
  %125 = vmatmul.bf16.gmra.mxu0 %v90
  %v126 = vpop.f32.mrf.mxu0
  %v127 = vadd.f32 0.0, %v126
  %v128 = vpop.f32.mrf.mxu0
  %v129 = vadd.f32 0.0, %v128
  %130 = vmatmul.bf16.gmra.mxu0 %v93
  %v131 = vpop.f32.mrf.mxu0
  %v132 = vadd.f32 0.0, %v131
  %v133 = vpop.f32.mrf.mxu0
  %v134 = vadd.f32 0.0, %v133
  %135 = vmatmul.bf16.gmra.mxu0 %v96
  %v136 = vpop.f32.mrf.mxu0
  %v137 = vadd.f32 0.0, %v136
  %v138 = vpop.f32.mrf.mxu0
  %v139 = vadd.f32 0.0, %v138
  %140 = vmatmul.bf16.gmra.mxu0 %v99
  %v141 = vpop.f32.mrf.mxu0
  %v142 = vadd.f32 0.0, %v141
  %v143 = vpop.f32.mrf.mxu0
  %v144 = vadd.f32 0.0, %v143
  %145 = vmatmul.bf16.gmra.mxu0 %v102
  %v146 = vpop.f32.mrf.mxu0
  %v147 = vadd.f32 0.0, %v146
  %v148 = vpop.f32.mrf.mxu0
  %v149 = vadd.f32 0.0, %v148
  %150 = vmatmul.bf16.gmra.mxu0 %v105
  %v151 = vpop.f32.mrf.mxu0
  %v152 = vadd.f32 0.0, %v151
  %v153 = vpop.f32.mrf.mxu0
  %v154 = vadd.f32 0.0, %v153
  %155 = vdwg.mxu0
  %v156 = vld [vmem:[%s2] sm:$0x1]
  %v158 = vperm.slane %v156, 0
  %v160 = vmul.f32 %v117, %v158
  %v161 = vmul.f32 %v119, %v158
  %v162 = vmul.f32 %v122, %v158
  %v163 = vmul.f32 %v124, %v158
  %v164 = vmul.f32 %v127, %v158
  %v165 = vmul.f32 %v129, %v158
  %v166 = vmul.f32 %v132, %v158
  %v167 = vmul.f32 %v134, %v158
  %v168 = vmul.f32 %v137, %v158
  %v169 = vmul.f32 %v139, %v158
  %v170 = vmul.f32 %v142, %v158
  %v171 = vmul.f32 %v144, %v158
  %v172 = vmul.f32 %v147, %v158
  %v173 = vmul.f32 %v149, %v158
  %v174 = vmul.f32 %v152, %v158
  %v175 = vmul.f32 %v154, %v158
  %v176 = vld [vmem:[%s3] sm:$0x1]
  %v178 = vperm.slane %v176, 0
  %v180 = vadd.f32 %v160, %v178
  %v181 = vadd.f32 %v161, %v178
  %v182 = vadd.f32 %v162, %v178
  %v183 = vadd.f32 %v163, %v178
  %v184 = vadd.f32 %v164, %v178
  %v185 = vadd.f32 %v165, %v178
  %v186 = vadd.f32 %v166, %v178
  %v187 = vadd.f32 %v167, %v178
  %v188 = vadd.f32 %v168, %v178
  %v189 = vadd.f32 %v169, %v178
  %v190 = vadd.f32 %v170, %v178
  %v191 = vadd.f32 %v171, %v178
  %v192 = vadd.f32 %v172, %v178
  %v193 = vadd.f32 %v173, %v178
  %v194 = vadd.f32 %v174, %v178
  %v195 = vadd.f32 %v175, %v178
  %vm196 = vcmask 261120
  %197 = vst.msk [vmem:[%s4] sm:$0xff] %vm196, %v180
  %198 = vst.msk [vmem:[%s4 + $0x8] sm:$0xff] %vm196, %v181
  %199 = vst.msk [vmem:[%s4 + $0x10] sm:$0xff] %vm196, %v182
  %200 = vst.msk [vmem:[%s4 + $0x18] sm:$0xff] %vm196, %v183
  %201 = vst.msk [vmem:[%s4 + $0x20] sm:$0xff] %vm196, %v184
  %202 = vst.msk [vmem:[%s4 + $0x28] sm:$0xff] %vm196, %v185
  %203 = vst.msk [vmem:[%s4 + $0x30] sm:$0xff] %vm196, %v186
  %204 = vst.msk [vmem:[%s4 + $0x38] sm:$0xff] %vm196, %v187
  %205 = vst.msk [vmem:[%s4 + $0x40] sm:$0xff] %vm196, %v188
  %206 = vst.msk [vmem:[%s4 + $0x48] sm:$0xff] %vm196, %v189
  %207 = vst.msk [vmem:[%s4 + $0x50] sm:$0xff] %vm196, %v190
  %208 = vst.msk [vmem:[%s4 + $0x58] sm:$0xff] %vm196, %v191
  %209 = vst.msk [vmem:[%s4 + $0x60] sm:$0xff] %vm196, %v192
  %210 = vst.msk [vmem:[%s4 + $0x68] sm:$0xff] %vm196, %v193
  %211 = vst.msk [vmem:[%s4 + $0x70] sm:$0xff] %vm196, %v194
  %212 = vst.msk [vmem:[%s4 + $0x78] sm:$0xff] %vm196, %v195
  // Predicated region
  $region18: #{basic_block_forward.6} parent=0 // pred_check
    _
  $region19: #{basic_block_forward.6} parent=0 // pred_check_branch
    %214 = sbr.rel (0) target = $region21
  $region20: #{basic_block_forward.6} parent=0 // pred_region
    _
  $region21: #{basic_block_forward.6} parent=0 // pred_fallthru
    _
  // Predicated region
  $region22: #{basic_block_forward.6} parent=0 // pred_check
    _
  $region23: #{basic_block_forward.6} parent=0 // pred_check_branch
    %216 = sbr.rel (0) target = $region25
  $region24: #{basic_block_forward.6} parent=0 // pred_region
    _
  $region25: #{basic_block_forward.6} parent=0 // pred_fallthru
    _

// kernel: basic_block_forward.4
$region0: #{basic_block_forward.4}
  #allocation0 [shape = 'u32[]', space=smem, size = 0x4, offset = 0x4, fixed_abs, tag = 'smem constant byte address 0x4 - core index']
  #allocation1 [shape = 'u32[72,128]{1,0:T(1,128)}', space=vmem, size = 0x9000, scoped, tag = 'internal scratch']
  %s0 = inlined_call_operand.vmem [shape: bf16[2,4,9,9,16], index: 0, kind: input, shape index: {}]
  %s1 = inlined_call_operand.vmem [shape: bf16[9,16,32], index: 1, kind: input, shape index: {}]
  %s2 = inlined_call_operand.vmem [shape: f32[1,32], index: 2, kind: input, shape index: {}]
  %s3 = inlined_call_operand.vmem [shape: f32[1,32], index: 3, kind: input, shape index: {}]
  %s4 = inlined_call_operand.vmem [shape: bf16[2,64,32], index: 4, kind: output, shape index: {}]
  %s5 = sld [smem:[#allocation0]]
  $region49: #{basic_block_forward.4} parent=0
    _
  %s7 = ssub.s32 1, %s5
  %s8 = scalar_select 0, %s7, %s5
  loop: start=0, step=1, limit=4
  $region2: #{basic_block_forward.4} parent=0 // loop_pre_header
    _
  $region3: #{basic_block_forward.4} parent=0 // loop_header
    %s10 = sphi 0, %s14
    %p11 = scmp.ge.s32.totalorder %s10, 4
    %s20 = sphi 0, %s22
    %s23 = sphi 0, %s20
    %s24 = sphi 0, %s23
    %s40 = sphi 0, %s24
    %s44 = sphi 0, %s44
    %s46 = sphi 0, %s44
    %s47 = sphi 0, %s46
    %s61 = sphi 0, %s47
    %s65 = sphi 0, %s65
    %s67 = sphi 0, %s65
    %s68 = sphi 0, %s67
    %s82 = sphi 0, %s68
    %s86 = sphi 0, %s86
    %s88 = sphi 0, %s86
    %s89 = sphi 0, %s88
    %s103 = sphi 0, %s89
    %s109 = sphi 0, %s111
    %s112 = sphi 0, %s109
    %s113 = sphi 0, %s112
    %s129 = sphi 0, %s113
  $region4: #{basic_block_forward.4} parent=0 // loop_header_branch
    %13 = sbr.rel (%p11) target = $region8
  $region5: #{basic_block_forward.4} parent=0 // loop_body
    %s15 = ssub.s32 %s10, 1
    %s16 = ssub.s32 %s10, 2
    %s17 = sadd.s32 %s10, 1
    %s18 = ssub.s32 %s10, %s17
    %p19 = scmp.eq.s32.totalorder %s18, 0
    %s21 = sadd.s32 %s20, 1
    %s22 = scalar_select %p19, %s20, %s21
    %p25 = pneg %p19
    %p26 = scmp.eq.s32.totalorder %s10, 1
    %p27 = por %p25, %p26
    %p28 = scmp.ne.s32.totalorder %s20, %s23
    %p29 = scmp.eq.s32.totalorder %s10, 0
    %p30 = por %p28, %p29
    %p31 = scmp.ne.s32.totalorder %s20, %s23
    %p32 = scmp.eq.s32.totalorder %s15, 1
    %p33 = por %p31, %p32
    %p34 = scmp.ne.s32.totalorder %s23, %s24
    %p35 = scmp.eq.s32.totalorder %s15, 0
    %p36 = por %p34, %p35
    %p37 = scmp.ne.s32.totalorder %s23, %s24
    %p38 = scmp.eq.s32.totalorder %s16, 1
    %p39 = por %p37, %p38
    %p41 = scmp.ne.s32.totalorder %s24, %s40
    %p42 = scmp.eq.s32.totalorder %s16, 0
    %p43 = por %p41, %p42
    %s45 = sadd.s32 %s44, 1
    %p48 = scmp.eq.s32.totalorder %s10, 1
    %p49 = scmp.ne.s32.totalorder %s44, %s46
    %p50 = scmp.eq.s32.totalorder %s10, 0
    %p51 = por %p49, %p50
    %p52 = scmp.ne.s32.totalorder %s44, %s46
    %p53 = scmp.eq.s32.totalorder %s15, 1
    %p54 = por %p52, %p53
    %p55 = scmp.ne.s32.totalorder %s46, %s47
    %p56 = scmp.eq.s32.totalorder %s15, 0
    %p57 = por %p55, %p56
    %p58 = scmp.ne.s32.totalorder %s46, %s47
    %p59 = scmp.eq.s32.totalorder %s16, 1
    %p60 = por %p58, %p59
    %p62 = scmp.ne.s32.totalorder %s47, %s61
    %p63 = scmp.eq.s32.totalorder %s16, 0
    %p64 = por %p62, %p63
    %s66 = sadd.s32 %s65, 1
    %p69 = scmp.eq.s32.totalorder %s10, 1
    %p70 = scmp.ne.s32.totalorder %s65, %s67
    %p71 = scmp.eq.s32.totalorder %s10, 0
    %p72 = por %p70, %p71
    %p73 = scmp.ne.s32.totalorder %s65, %s67
    %p74 = scmp.eq.s32.totalorder %s15, 1
    %p75 = por %p73, %p74
    %p76 = scmp.ne.s32.totalorder %s67, %s68
    %p77 = scmp.eq.s32.totalorder %s15, 0
    %p78 = por %p76, %p77
    %p79 = scmp.ne.s32.totalorder %s67, %s68
    %p80 = scmp.eq.s32.totalorder %s16, 1
    %p81 = por %p79, %p80
    %p83 = scmp.ne.s32.totalorder %s68, %s82
    %p84 = scmp.eq.s32.totalorder %s16, 0
    %p85 = por %p83, %p84
    %s87 = sadd.s32 %s86, 1
    %p90 = scmp.eq.s32.totalorder %s10, 1
    %p91 = scmp.ne.s32.totalorder %s86, %s88
    %p92 = scmp.eq.s32.totalorder %s10, 0
    %p93 = por %p91, %p92
    %p94 = scmp.ne.s32.totalorder %s86, %s88
    %p95 = scmp.eq.s32.totalorder %s15, 1
    %p96 = por %p94, %p95
    %p97 = scmp.ne.s32.totalorder %s88, %s89
    %p98 = scmp.eq.s32.totalorder %s15, 0
    %p99 = por %p97, %p98
    %p100 = scmp.ne.s32.totalorder %s88, %s89
    %p101 = scmp.eq.s32.totalorder %s16, 1
    %p102 = por %p100, %p101
    %p104 = scmp.ne.s32.totalorder %s89, %s103
    %p105 = scmp.eq.s32.totalorder %s16, 0
    %p106 = por %p104, %p105
    %s107 = ssub.s32 %s10, %s17
    %p108 = scmp.eq.s32.totalorder %s107, 0
    %s110 = sadd.s32 %s109, 1
    %s111 = scalar_select %p108, %s109, %s110
    %p114 = pneg %p108
    %p115 = scmp.eq.s32.totalorder %s10, 1
    %p116 = por %p114, %p115
    %p117 = scmp.ne.s32.totalorder %s109, %s112
    %p118 = scmp.eq.s32.totalorder %s10, 0
    %p119 = por %p117, %p118
    %p120 = scmp.ne.s32.totalorder %s109, %s112
    %p121 = scmp.eq.s32.totalorder %s15, 1
    %p122 = por %p120, %p121
    %p123 = scmp.ne.s32.totalorder %s112, %s113
    %p124 = scmp.eq.s32.totalorder %s15, 0
    %p125 = por %p123, %p124
    %p126 = scmp.ne.s32.totalorder %s112, %s113
    %p127 = scmp.eq.s32.totalorder %s16, 1
    %p128 = por %p126, %p127
    %p130 = scmp.ne.s32.totalorder %s113, %s129
    %p131 = scmp.eq.s32.totalorder %s16, 0
    %p132 = por %p130, %p131
    %p133 = scmp.le.s32.totalorder 1, %s10
    %p134 = scmp.lt.s32.totalorder %s10, 3
    %p135 = pnand %p133, %p134
    %p136 = pneg %p135
    // Predicated region
    $region9: #{basic_block_forward.4} parent=5 // pred_check
      _
    $region10: #{basic_block_forward.4} parent=5 // pred_check_branch
      %138 = sbr.rel (%p135) target = $region12
    $region11: #{basic_block_forward.4} parent=5 // pred_region
      %s139 = ssub.s32 %s10, 1
      // Predicated region
      $region13: #{basic_block_forward.4} parent=11 // pred_check
        %p140 = pneg %p57
      $region14: #{basic_block_forward.4} parent=11 // pred_check_branch
        %142 = sbr.rel (%p140) target = $region16
      $region15: #{basic_block_forward.4} parent=11 // pred_region
        _
      $region16: #{basic_block_forward.4} parent=11 // pred_fallthru
        _
      // Predicated region
      $region17: #{basic_block_forward.4} parent=11 // pred_check
        %p143 = pneg %p78
      $region18: #{basic_block_forward.4} parent=11 // pred_check_branch
        %145 = sbr.rel (%p143) target = $region20
      $region19: #{basic_block_forward.4} parent=11 // pred_region
        _
      $region20: #{basic_block_forward.4} parent=11 // pred_fallthru
        _
      // Predicated region
      $region21: #{basic_block_forward.4} parent=11 // pred_check
        %p146 = pneg %p99
      $region22: #{basic_block_forward.4} parent=11 // pred_check_branch
        %148 = sbr.rel (%p146) target = $region24
      $region23: #{basic_block_forward.4} parent=11 // pred_region
        _
      $region24: #{basic_block_forward.4} parent=11 // pred_fallthru
        _
    $region12: #{basic_block_forward.4} parent=5 // pred_fallthru
      _
    %p149 = scmp.lt.s32.totalorder %s10, 2
    // Predicated region
    $region25: #{basic_block_forward.4} parent=5 // pred_check
      %p150 = pneg %p149
    $region26: #{basic_block_forward.4} parent=5 // pred_check_branch
      %152 = sbr.rel (%p150) target = $region28
    $region27: #{basic_block_forward.4} parent=5 // pred_region
      // Predicated region
      $region29: #{basic_block_forward.4} parent=27 // pred_check
        %p153 = pneg %p30
      $region30: #{basic_block_forward.4} parent=27 // pred_check_branch
        %155 = sbr.rel (%p153) target = $region32
      $region31: #{basic_block_forward.4} parent=27 // pred_region
        %p156 = scmp.lt.s32.totalorder %s10, 1
        %s157 = scalar_select %p156, %s10, 1
        %s158 = smul.addr %s157, 72
        %s159 = smul.addr %s158, 4
        %s160 = scalar_lea.vmem %s0, %s159
      $region32: #{basic_block_forward.4} parent=27 // pred_fallthru
        _
    $region28: #{basic_block_forward.4} parent=5 // pred_fallthru
      _
    %p161 = scmp.le.s32.totalorder 1, %s10
    %p162 = scmp.lt.s32.totalorder %s10, 3
    %p163 = pnand %p161, %p162
    %p164 = pneg %p163
    // Predicated region
    $region33: #{basic_block_forward.4} parent=5 // pred_check
      _
    $region34: #{basic_block_forward.4} parent=5 // pred_check_branch
      %166 = sbr.rel (%p163) target = $region36
    $region35: #{basic_block_forward.4} parent=5 // pred_region
      %s167 = ssub.s32 %s10, 1
      %p168 = scmp.lt.s32.totalorder %s15, 1
      %s169 = scalar_select %p168, %s15, 1
      %s170 = smul.addr %s169, 72
      %s171 = smul.addr %s170, 4
      %s172 = scalar_lea.vmem %s0, %s171
      %p173 = pneg %p36
      %p174 = pneg %p33
      %p175 = pneg %p57
      %p176 = pneg %p54
      %p177 = pneg %p78
      %p178 = pneg %p75
      %p179 = pneg %p99
      %p180 = pneg %p96
      %p181 = pneg %p125
      %p182 = pneg %p122
      %p183 = scmp.lt.s32.totalorder %s15, 1
      %s184 = scalar_select %p183, %s15, 1
      %s185 = smul.addr %s184, 8
      %s186 = smul.addr %s185, 4
      %s187 = scalar_lea.vmem %s4, %s186
      %p188 = scmp.lt.s32.totalorder %s15, 1
      %s189 = scalar_select %p188, %s15, 1
      %s190 = smul.addr %s189, 72
      %s191 = smul.addr %s190, 4
      %s192 = scalar_lea.vmem %s0, %s191
      %p193 = scmp.lt.s32.totalorder %s15, 1
      %s194 = scalar_select %p193, %s15, 1
      %s195 = smul.addr %s194, 8
      %s196 = smul.addr %s195, 4
      %s197 = scalar_lea.vmem %s4, %s196
      %v199 = vld [vmem:[%s192] sm:$0xf]
      %v200 = vld [vmem:[%s192 + $0x4] sm:$0x1]
      %v201 = vld [vmem:[%s192 + $0x8] sm:$0xf]
      %v202 = vld [vmem:[%s192 + $0xc] sm:$0x1]
      %v203 = vld [vmem:[%s192 + $0x10] sm:$0xf]
      %v204 = vld [vmem:[%s192 + $0x14] sm:$0x1]
      %v205 = vld [vmem:[%s192 + $0x18] sm:$0xf]
      %v206 = vld [vmem:[%s192 + $0x1c] sm:$0x1]
      %v207 = vld [vmem:[%s192 + $0x20] sm:$0xf]
      %v208 = vld [vmem:[%s192 + $0x24] sm:$0x1]
      %v209 = vld [vmem:[%s192 + $0x28] sm:$0xf]
      %v210 = vld [vmem:[%s192 + $0x2c] sm:$0x1]
      %v211 = vld [vmem:[%s192 + $0x30] sm:$0xf]
      %v212 = vld [vmem:[%s192 + $0x34] sm:$0x1]
      %v213 = vld [vmem:[%s192 + $0x38] sm:$0xf]
      %v214 = vld [vmem:[%s192 + $0x3c] sm:$0x1]
      %v215 = vld [vmem:[%s192 + $0x40] sm:$0xf]
      %v216 = vld [vmem:[%s192 + $0x44] sm:$0x1]
      %v217 = vunpack.c.l.bf16 %v199
      %v218 = vunpack.c.l.bf16 %v200
      %v219 = vunpack.c.l.bf16 %v201
      %v220 = vunpack.c.l.bf16 %v202
      %v221 = vunpack.c.l.bf16 %v203
      %v222 = vunpack.c.l.bf16 %v204
      %v223 = vunpack.c.l.bf16 %v205
      %v224 = vunpack.c.l.bf16 %v206
      %v225 = vunpack.c.l.bf16 %v207
      %v226 = vunpack.c.l.bf16 %v208
      %v227 = vunpack.c.l.bf16 %v209
      %v228 = vunpack.c.l.bf16 %v210
      %v229 = vunpack.c.l.bf16 %v211
      %v230 = vunpack.c.l.bf16 %v212
      %v231 = vunpack.c.l.bf16 %v213
      %v232 = vunpack.c.l.bf16 %v214
      %v233 = vunpack.c.l.bf16 %v215
      %v234 = vunpack.c.l.bf16 %v216
      %s235 = scalar_lea.vmem %s192, 72
      %v236 = vld [vmem:[%s235] sm:$0xf]
      %v237 = vld [vmem:[%s235 + $0x8] sm:$0xf]
      %v238 = vld [vmem:[%s235 + $0x10] sm:$0xf]
      %v239 = vld [vmem:[%s235 + $0x18] sm:$0xf]
      %v240 = vld [vmem:[%s235 + $0x20] sm:$0xf]
      %v241 = vld [vmem:[%s235 + $0x28] sm:$0xf]
      %v242 = vld [vmem:[%s235 + $0x30] sm:$0xf]
      %v243 = vld [vmem:[%s235 + $0x38] sm:$0xf]
      %v244 = vld [vmem:[%s235 + $0x40] sm:$0xf]
      %v245 = vunpack.c.l.bf16 %v236
      %v246 = vunpack.c.l.bf16 %v237
      %v247 = vunpack.c.l.bf16 %v238
      %v248 = vunpack.c.l.bf16 %v239
      %v249 = vunpack.c.l.bf16 %v240
      %v250 = vunpack.c.l.bf16 %v241
      %v251 = vunpack.c.l.bf16 %v242
      %v252 = vunpack.c.l.bf16 %v243
      %v253 = vunpack.c.l.bf16 %v244
      %s254 = scalar_lea.vmem %s192, 144
      %v255 = vld [vmem:[%s254] sm:$0xf]
      %v256 = vld [vmem:[%s254 + $0x4] sm:$0x1]
      %v257 = vld [vmem:[%s254 + $0x8] sm:$0xf]
      %v258 = vld [vmem:[%s254 + $0xc] sm:$0x1]
      %v259 = vld [vmem:[%s254 + $0x10] sm:$0xf]
      %v260 = vld [vmem:[%s254 + $0x14] sm:$0x1]
      %v261 = vld [vmem:[%s254 + $0x18] sm:$0xf]
      %v262 = vld [vmem:[%s254 + $0x1c] sm:$0x1]
      %v263 = vld [vmem:[%s254 + $0x20] sm:$0xf]
      %v264 = vld [vmem:[%s254 + $0x24] sm:$0x1]
      %v265 = vld [vmem:[%s254 + $0x28] sm:$0xf]
      %v266 = vld [vmem:[%s254 + $0x2c] sm:$0x1]
      %v267 = vld [vmem:[%s254 + $0x30] sm:$0xf]
      %v268 = vld [vmem:[%s254 + $0x34] sm:$0x1]
      %v269 = vld [vmem:[%s254 + $0x38] sm:$0xf]
      %v270 = vld [vmem:[%s254 + $0x3c] sm:$0x1]
      %v271 = vunpack.c.l.bf16 %v255
      %v272 = vunpack.c.l.bf16 %v256
      %v273 = vunpack.c.l.bf16 %v257
      %v274 = vunpack.c.l.bf16 %v258
      %v275 = vunpack.c.l.bf16 %v259
      %v276 = vunpack.c.l.bf16 %v260
      %v277 = vunpack.c.l.bf16 %v261
      %v278 = vunpack.c.l.bf16 %v262
      %v279 = vunpack.c.l.bf16 %v263
      %v280 = vunpack.c.l.bf16 %v264
      %v281 = vunpack.c.l.bf16 %v265
      %v282 = vunpack.c.l.bf16 %v266
      %v283 = vunpack.c.l.bf16 %v267
      %v284 = vunpack.c.l.bf16 %v268
      %v285 = vunpack.c.l.bf16 %v269
      %v286 = vunpack.c.l.bf16 %v270
      %s287 = scalar_lea.vmem %s192, 216
      %v288 = vld [vmem:[%s287] sm:$0xf]
      %v289 = vld [vmem:[%s287 + $0x8] sm:$0xf]
      %v290 = vld [vmem:[%s287 + $0x10] sm:$0xf]
      %v291 = vld [vmem:[%s287 + $0x18] sm:$0xf]
      %v292 = vld [vmem:[%s287 + $0x20] sm:$0xf]
      %v293 = vld [vmem:[%s287 + $0x28] sm:$0xf]
      %v294 = vld [vmem:[%s287 + $0x30] sm:$0xf]
      %v295 = vld [vmem:[%s287 + $0x38] sm:$0xf]
      %v296 = vunpack.c.l.bf16 %v288
      %v297 = vunpack.c.l.bf16 %v289
      %v298 = vunpack.c.l.bf16 %v290
      %v299 = vunpack.c.l.bf16 %v291
      %v300 = vunpack.c.l.bf16 %v292
      %v301 = vunpack.c.l.bf16 %v293
      %v302 = vunpack.c.l.bf16 %v294
      %v303 = vunpack.c.l.bf16 %v295
      %v304 = vpack.c.bf16 %v219, %v217
      %v305 = vpack.c.bf16 %v223, %v221
      %v306 = vpack.c.bf16 %v227, %v225
      %v307 = vpack.c.bf16 %v231, %v229
      %v308 = vld [vmem:[%s1] sm:$0xf]
      %v309 = vld [vmem:[%s1 + $0x4] sm:$0xf]
      %v310 = vpack.c.bf16 %v246, %v245
      %v311 = vpack.c.bf16 %v248, %v247
      %v312 = vpack.c.bf16 %v250, %v249
      %v313 = vpack.c.bf16 %v252, %v251
      %s314 = scalar_lea.vmem %s1, 8
      %v315 = vld [vmem:[%s314] sm:$0xf]
      %v316 = vld [vmem:[%s314 + $0x4] sm:$0xf]
      %v319 = vunpack.c.l.b16 %v315
      %v320 = vunpack.c.l.b16 %v316
      %v321 = vpack.c.b16 %v320, %v319
      %vm323 = vcmask 130048
      %v325 = vsel %vm323, %v310, 0
      %v328 = vsel %vm323, %v311, 0
      %v331 = vsel %vm323, %v312, 0
      %v334 = vsel %vm323, %v313, 0
      %336 = vmatpush.bf16.msra.mxu0 0
      %337 = vmatpush.bf16.msra.mxu0 0
      %338 = vmatpush.bf16.msra.mxu0 0
      %339 = vmatpush.bf16.msra.mxu0 0
      %340 = vmatpush.bf16.msra.mxu0 0
      %341 = vmatpush.bf16.msra.mxu0 0
      %342 = vmatpush.bf16.msra.mxu0 0
      %343 = vmatpush.bf16.msra.mxu0 %v321
      %344 = vmatmul.bf16.gmra.mxu0 %v325
      %v345 = vpop.f32.mrf.mxu0
      %v346 = vadd.f32 0.0, %v345
      %v347 = vpop.f32.mrf.mxu0
      %v348 = vadd.f32 0.0, %v347
      %349 = vmatmul.bf16.gmra.mxu0 %v328
      %v350 = vpop.f32.mrf.mxu0
      %v351 = vadd.f32 0.0, %v350
      %v352 = vpop.f32.mrf.mxu0
      %v353 = vadd.f32 0.0, %v352
      %354 = vmatmul.bf16.gmra.mxu0 %v331
      %v355 = vpop.f32.mrf.mxu0
      %v356 = vadd.f32 0.0, %v355
      %v357 = vpop.f32.mrf.mxu0
      %v358 = vadd.f32 0.0, %v357
      %359 = vmatmul.bf16.gmra.mxu0 %v334
      %v360 = vpop.f32.mrf.mxu0
      %v361 = vadd.f32 0.0, %v360
      %v362 = vpop.f32.mrf.mxu0
      %v363 = vadd.f32 0.0, %v362
      %364 = vdwg.mxu0
      %v367 = vunpack.c.l.b16 %v308
      %v368 = vunpack.c.l.b16 %v309
      %v369 = vpack.c.b16 %v368, %v367
      %v372 = vsel %vm323, %v304, 0
      %v375 = vsel %vm323, %v305, 0
      %v378 = vsel %vm323, %v306, 0
      %v381 = vsel %vm323, %v307, 0
      %383 = vmatpush.bf16.msra.mxu0 0
      %384 = vmatpush.bf16.msra.mxu0 0
      %385 = vmatpush.bf16.msra.mxu0 0
      %386 = vmatpush.bf16.msra.mxu0 0
      %387 = vmatpush.bf16.msra.mxu0 0
      %388 = vmatpush.bf16.msra.mxu0 0
      %389 = vmatpush.bf16.msra.mxu0 0
      %390 = vmatpush.bf16.msra.mxu0 %v369
      %391 = vmatmul.bf16.gmra.mxu0 %v372
      %v392 = vpop.f32.mrf.mxu0
      %v393 = vadd.f32 %v346, %v392
      %v394 = vpop.f32.mrf.mxu0
      %v395 = vadd.f32 %v348, %v394
      %396 = vmatmul.bf16.gmra.mxu0 %v375
      %v397 = vpop.f32.mrf.mxu0
      %v398 = vadd.f32 %v351, %v397
      %v399 = vpop.f32.mrf.mxu0
      %v400 = vadd.f32 %v353, %v399
      %401 = vmatmul.bf16.gmra.mxu0 %v378
      %v402 = vpop.f32.mrf.mxu0
      %v403 = vadd.f32 %v356, %v402
      %v404 = vpop.f32.mrf.mxu0
      %v405 = vadd.f32 %v358, %v404
      %406 = vmatmul.bf16.gmra.mxu0 %v381
      %v407 = vpop.f32.mrf.mxu0
      %v408 = vadd.f32 %v361, %v407
      %v409 = vpop.f32.mrf.mxu0
      %v410 = vadd.f32 %v363, %v409
      %411 = vdwg.mxu0
      %vm428 = vcmask 1046528
      %v429 = vrot.slane %v217, 1
      %v430 = vrot.slane %v218, 1
      %v431 = vsel %vm428, %v429, %v430
      %v432 = vrot.slane %v219, 1
      %v433 = vrot.slane %v220, 1
      %v434 = vsel %vm428, %v432, %v433
      %v435 = vrot.slane %v221, 1
      %v436 = vrot.slane %v222, 1
      %v437 = vsel %vm428, %v435, %v436
      %v438 = vrot.slane %v223, 1
      %v439 = vrot.slane %v224, 1
      %v440 = vsel %vm428, %v438, %v439
      %v441 = vrot.slane %v225, 1
      %v442 = vrot.slane %v226, 1
      %v443 = vsel %vm428, %v441, %v442
      %v444 = vrot.slane %v227, 1
      %v445 = vrot.slane %v228, 1
      %v446 = vsel %vm428, %v444, %v445
      %v447 = vrot.slane %v229, 1
      %v448 = vrot.slane %v230, 1
      %v449 = vsel %vm428, %v447, %v448
      %v450 = vrot.slane %v231, 1
      %v451 = vrot.slane %v232, 1
      %v452 = vsel %vm428, %v450, %v451
      %v461 = vpack.c.bf16 %v434, %v431
      %v462 = vpack.c.bf16 %v440, %v437
      %v463 = vpack.c.bf16 %v446, %v443
      %v464 = vpack.c.bf16 %v452, %v449
      %s465 = scalar_lea.vmem %s1, 16
      %v466 = vld [vmem:[%s465] sm:$0xf]
      %v467 = vld [vmem:[%s465 + $0x4] sm:$0xf]
      %v470 = vunpack.c.l.b16 %v466
      %v471 = vunpack.c.l.b16 %v467
      %v472 = vpack.c.b16 %v471, %v470
      %v475 = vsel %vm323, %v461, 0
      %v478 = vsel %vm323, %v462, 0
      %v481 = vsel %vm323, %v463, 0
      %v484 = vsel %vm323, %v464, 0
      %486 = vmatpush.bf16.msra.mxu0 0
      %487 = vmatpush.bf16.msra.mxu0 0
      %488 = vmatpush.bf16.msra.mxu0 0
      %489 = vmatpush.bf16.msra.mxu0 0
      %490 = vmatpush.bf16.msra.mxu0 0
      %491 = vmatpush.bf16.msra.mxu0 0
      %492 = vmatpush.bf16.msra.mxu0 0
      %493 = vmatpush.bf16.msra.mxu0 %v472
      %494 = vmatmul.bf16.gmra.mxu0 %v475
      %v495 = vpop.f32.mrf.mxu0
      %v496 = vadd.f32 0.0, %v495
      %v497 = vpop.f32.mrf.mxu0
      %v498 = vadd.f32 0.0, %v497
      %499 = vmatmul.bf16.gmra.mxu0 %v478
      %v500 = vpop.f32.mrf.mxu0
      %v501 = vadd.f32 0.0, %v500
      %v502 = vpop.f32.mrf.mxu0
      %v503 = vadd.f32 0.0, %v502
      %504 = vmatmul.bf16.gmra.mxu0 %v481
      %v505 = vpop.f32.mrf.mxu0
      %v506 = vadd.f32 0.0, %v505
      %v507 = vpop.f32.mrf.mxu0
      %v508 = vadd.f32 0.0, %v507
      %509 = vmatmul.bf16.gmra.mxu0 %v484
      %v510 = vpop.f32.mrf.mxu0
      %v511 = vadd.f32 0.0, %v510
      %v512 = vpop.f32.mrf.mxu0
      %v513 = vadd.f32 0.0, %v512
      %514 = vdwg.mxu0
      %v515 = vadd.f32 %v393, %v496
      %v516 = vadd.f32 %v395, %v498
      %v517 = vadd.f32 %v398, %v501
      %v518 = vadd.f32 %v400, %v503
      %v519 = vadd.f32 %v403, %v506
      %v520 = vadd.f32 %v405, %v508
      %v521 = vadd.f32 %v408, %v511
      %v522 = vadd.f32 %v410, %v513
      %v523 = vpack.c.bf16 %v273, %v271
      %v524 = vpack.c.bf16 %v277, %v275
      %v525 = vpack.c.bf16 %v281, %v279
      %v526 = vpack.c.bf16 %v285, %v283
      %s527 = scalar_lea.vmem %s1, 24
      %v528 = vld [vmem:[%s527] sm:$0xf]
      %v529 = vld [vmem:[%s527 + $0x4] sm:$0xf]
      %v532 = vunpack.c.l.b16 %v528
      %v533 = vunpack.c.l.b16 %v529
      %v534 = vpack.c.b16 %v533, %v532
      %v537 = vsel %vm323, %v523, 0
      %v540 = vsel %vm323, %v524, 0
      %v543 = vsel %vm323, %v525, 0
      %v546 = vsel %vm323, %v526, 0
      %548 = vmatpush.bf16.msra.mxu0 0
      %549 = vmatpush.bf16.msra.mxu0 0
      %550 = vmatpush.bf16.msra.mxu0 0
      %551 = vmatpush.bf16.msra.mxu0 0
      %552 = vmatpush.bf16.msra.mxu0 0
      %553 = vmatpush.bf16.msra.mxu0 0
      %554 = vmatpush.bf16.msra.mxu0 0
      %555 = vmatpush.bf16.msra.mxu0 %v534
      %556 = vmatmul.bf16.gmra.mxu0 %v537
      %v557 = vpop.f32.mrf.mxu0
      %v558 = vadd.f32 0.0, %v557
      %v559 = vpop.f32.mrf.mxu0
      %v560 = vadd.f32 0.0, %v559
      %561 = vmatmul.bf16.gmra.mxu0 %v540
      %v562 = vpop.f32.mrf.mxu0
      %v563 = vadd.f32 0.0, %v562
      %v564 = vpop.f32.mrf.mxu0
      %v565 = vadd.f32 0.0, %v564
      %566 = vmatmul.bf16.gmra.mxu0 %v543
      %v567 = vpop.f32.mrf.mxu0
      %v568 = vadd.f32 0.0, %v567
      %v569 = vpop.f32.mrf.mxu0
      %v570 = vadd.f32 0.0, %v569
      %571 = vmatmul.bf16.gmra.mxu0 %v546
      %v572 = vpop.f32.mrf.mxu0
      %v573 = vadd.f32 0.0, %v572
      %v574 = vpop.f32.mrf.mxu0
      %v575 = vadd.f32 0.0, %v574
      %576 = vdwg.mxu0
      %v577 = vadd.f32 %v515, %v558
      %v578 = vadd.f32 %v516, %v560
      %v579 = vadd.f32 %v517, %v563
      %v580 = vadd.f32 %v518, %v565
      %v581 = vadd.f32 %v519, %v568
      %v582 = vadd.f32 %v520, %v570
      %v583 = vadd.f32 %v521, %v573
      %v584 = vadd.f32 %v522, %v575
      %v585 = vpack.c.bf16 %v297, %v296
      %v586 = vpack.c.bf16 %v299, %v298
      %v587 = vpack.c.bf16 %v301, %v300
      %v588 = vpack.c.bf16 %v303, %v302
      %s589 = scalar_lea.vmem %s1, 32
      %v590 = vld [vmem:[%s589] sm:$0xf]
      %v591 = vld [vmem:[%s589 + $0x4] sm:$0xf]
      %v594 = vunpack.c.l.b16 %v590
      %v595 = vunpack.c.l.b16 %v591
      %v596 = vpack.c.b16 %v595, %v594
      %v599 = vsel %vm323, %v585, 0
      %v602 = vsel %vm323, %v586, 0
      %v605 = vsel %vm323, %v587, 0
      %v608 = vsel %vm323, %v588, 0
      %610 = vmatpush.bf16.msra.mxu0 0
      %611 = vmatpush.bf16.msra.mxu0 0
      %612 = vmatpush.bf16.msra.mxu0 0
      %613 = vmatpush.bf16.msra.mxu0 0
      %614 = vmatpush.bf16.msra.mxu0 0
      %615 = vmatpush.bf16.msra.mxu0 0
      %616 = vmatpush.bf16.msra.mxu0 0
      %617 = vmatpush.bf16.msra.mxu0 %v596
      %618 = vmatmul.bf16.gmra.mxu0 %v599
      %v619 = vpop.f32.mrf.mxu0
      %v620 = vadd.f32 0.0, %v619
      %v621 = vpop.f32.mrf.mxu0
      %v622 = vadd.f32 0.0, %v621
      %623 = vmatmul.bf16.gmra.mxu0 %v602
      %v624 = vpop.f32.mrf.mxu0
      %v625 = vadd.f32 0.0, %v624
      %v626 = vpop.f32.mrf.mxu0
      %v627 = vadd.f32 0.0, %v626
      %628 = vmatmul.bf16.gmra.mxu0 %v605
      %v629 = vpop.f32.mrf.mxu0
      %v630 = vadd.f32 0.0, %v629
      %v631 = vpop.f32.mrf.mxu0
      %v632 = vadd.f32 0.0, %v631
      %633 = vmatmul.bf16.gmra.mxu0 %v608
      %v634 = vpop.f32.mrf.mxu0
      %v635 = vadd.f32 0.0, %v634
      %v636 = vpop.f32.mrf.mxu0
      %v637 = vadd.f32 0.0, %v636
      %638 = vdwg.mxu0
      %v639 = vadd.f32 %v577, %v620
      %v640 = vadd.f32 %v578, %v622
      %v641 = vadd.f32 %v579, %v625
      %v642 = vadd.f32 %v580, %v627
      %v643 = vadd.f32 %v581, %v630
      %v644 = vadd.f32 %v582, %v632
      %v645 = vadd.f32 %v583, %v635
      %v646 = vadd.f32 %v584, %v637
      %v663 = vrot.slane %v271, 1
      %v664 = vrot.slane %v272, 1
      %v665 = vsel %vm428, %v663, %v664
      %v666 = vrot.slane %v273, 1
      %v667 = vrot.slane %v274, 1
      %v668 = vsel %vm428, %v666, %v667
      %v669 = vrot.slane %v275, 1
      %v670 = vrot.slane %v276, 1
      %v671 = vsel %vm428, %v669, %v670
      %v672 = vrot.slane %v277, 1
      %v673 = vrot.slane %v278, 1
      %v674 = vsel %vm428, %v672, %v673
      %v675 = vrot.slane %v279, 1
      %v676 = vrot.slane %v280, 1
      %v677 = vsel %vm428, %v675, %v676
      %v678 = vrot.slane %v281, 1
      %v679 = vrot.slane %v282, 1
      %v680 = vsel %vm428, %v678, %v679
      %v681 = vrot.slane %v283, 1
      %v682 = vrot.slane %v284, 1
      %v683 = vsel %vm428, %v681, %v682
      %v684 = vrot.slane %v285, 1
      %v685 = vrot.slane %v286, 1
      %v686 = vsel %vm428, %v684, %v685
      %v695 = vpack.c.bf16 %v668, %v665
      %v696 = vpack.c.bf16 %v674, %v671
      %v697 = vpack.c.bf16 %v680, %v677
      %v698 = vpack.c.bf16 %v686, %v683
      %s699 = scalar_lea.vmem %s1, 40
      %v700 = vld [vmem:[%s699] sm:$0xf]
      %v701 = vld [vmem:[%s699 + $0x4] sm:$0xf]
      %v704 = vunpack.c.l.b16 %v700
      %v705 = vunpack.c.l.b16 %v701
      %v706 = vpack.c.b16 %v705, %v704
      %v709 = vsel %vm323, %v695, 0
      %v712 = vsel %vm323, %v696, 0
      %v715 = vsel %vm323, %v697, 0
      %v718 = vsel %vm323, %v698, 0
      %720 = vmatpush.bf16.msra.mxu0 0
      %721 = vmatpush.bf16.msra.mxu0 0
      %722 = vmatpush.bf16.msra.mxu0 0
      %723 = vmatpush.bf16.msra.mxu0 0
      %724 = vmatpush.bf16.msra.mxu0 0
      %725 = vmatpush.bf16.msra.mxu0 0
      %726 = vmatpush.bf16.msra.mxu0 0
      %727 = vmatpush.bf16.msra.mxu0 %v706
      %728 = vmatmul.bf16.gmra.mxu0 %v709
      %v729 = vpop.f32.mrf.mxu0
      %v730 = vadd.f32 0.0, %v729
      %v731 = vpop.f32.mrf.mxu0
      %v732 = vadd.f32 0.0, %v731
      %733 = vmatmul.bf16.gmra.mxu0 %v712
      %v734 = vpop.f32.mrf.mxu0
      %v735 = vadd.f32 0.0, %v734
      %v736 = vpop.f32.mrf.mxu0
      %v737 = vadd.f32 0.0, %v736
      %738 = vmatmul.bf16.gmra.mxu0 %v715
      %v739 = vpop.f32.mrf.mxu0
      %v740 = vadd.f32 0.0, %v739
      %v741 = vpop.f32.mrf.mxu0
      %v742 = vadd.f32 0.0, %v741
      %743 = vmatmul.bf16.gmra.mxu0 %v718
      %v744 = vpop.f32.mrf.mxu0
      %v745 = vadd.f32 0.0, %v744
      %v746 = vpop.f32.mrf.mxu0
      %v747 = vadd.f32 0.0, %v746
      %748 = vdwg.mxu0
      %v749 = vadd.f32 %v639, %v730
      %v750 = vadd.f32 %v640, %v732
      %v751 = vadd.f32 %v641, %v735
      %v752 = vadd.f32 %v642, %v737
      %v753 = vadd.f32 %v643, %v740
      %v754 = vadd.f32 %v644, %v742
      %v755 = vadd.f32 %v645, %v745
      %v756 = vadd.f32 %v646, %v747
      %v757 = vpack.c.bf16 %v221, %v219
      %v758 = vpack.c.bf16 %v225, %v223
      %v759 = vpack.c.bf16 %v229, %v227
      %v760 = vpack.c.bf16 %v233, %v231
      %s761 = scalar_lea.vmem %s1, 48
      %v762 = vld [vmem:[%s761] sm:$0xf]
      %v763 = vld [vmem:[%s761 + $0x4] sm:$0xf]
      %v766 = vunpack.c.l.b16 %v762
      %v767 = vunpack.c.l.b16 %v763
      %v768 = vpack.c.b16 %v767, %v766
      %v771 = vsel %vm323, %v757, 0
      %v774 = vsel %vm323, %v758, 0
      %v777 = vsel %vm323, %v759, 0
      %v780 = vsel %vm323, %v760, 0
      %782 = vmatpush.bf16.msra.mxu0 0
      %783 = vmatpush.bf16.msra.mxu0 0
      %784 = vmatpush.bf16.msra.mxu0 0
      %785 = vmatpush.bf16.msra.mxu0 0
      %786 = vmatpush.bf16.msra.mxu0 0
      %787 = vmatpush.bf16.msra.mxu0 0
      %788 = vmatpush.bf16.msra.mxu0 0
      %789 = vmatpush.bf16.msra.mxu0 %v768
      %790 = vmatmul.bf16.gmra.mxu0 %v771
      %v791 = vpop.f32.mrf.mxu0
      %v792 = vadd.f32 0.0, %v791
      %v793 = vpop.f32.mrf.mxu0
      %v794 = vadd.f32 0.0, %v793
      %795 = vmatmul.bf16.gmra.mxu0 %v774
      %v796 = vpop.f32.mrf.mxu0
      %v797 = vadd.f32 0.0, %v796
      %v798 = vpop.f32.mrf.mxu0
      %v799 = vadd.f32 0.0, %v798
      %800 = vmatmul.bf16.gmra.mxu0 %v777
      %v801 = vpop.f32.mrf.mxu0
      %v802 = vadd.f32 0.0, %v801
      %v803 = vpop.f32.mrf.mxu0
      %v804 = vadd.f32 0.0, %v803
      %805 = vmatmul.bf16.gmra.mxu0 %v780
      %v806 = vpop.f32.mrf.mxu0
      %v807 = vadd.f32 0.0, %v806
      %v808 = vpop.f32.mrf.mxu0
      %v809 = vadd.f32 0.0, %v808
      %810 = vdwg.mxu0
      %v811 = vadd.f32 %v749, %v792
      %v812 = vadd.f32 %v750, %v794
      %v813 = vadd.f32 %v751, %v797
      %v814 = vadd.f32 %v752, %v799
      %v815 = vadd.f32 %v753, %v802
      %v816 = vadd.f32 %v754, %v804
      %v817 = vadd.f32 %v755, %v807
      %v818 = vadd.f32 %v756, %v809
      %v819 = vpack.c.bf16 %v247, %v246
      %v820 = vpack.c.bf16 %v249, %v248
      %v821 = vpack.c.bf16 %v251, %v250
      %v822 = vpack.c.bf16 %v253, %v252
      %s823 = scalar_lea.vmem %s1, 56
      %v824 = vld [vmem:[%s823] sm:$0xf]
      %v825 = vld [vmem:[%s823 + $0x4] sm:$0xf]
      %v828 = vunpack.c.l.b16 %v824
      %v829 = vunpack.c.l.b16 %v825
      %v830 = vpack.c.b16 %v829, %v828
      %v833 = vsel %vm323, %v819, 0
      %v836 = vsel %vm323, %v820, 0
      %v839 = vsel %vm323, %v821, 0
      %v842 = vsel %vm323, %v822, 0
      %844 = vmatpush.bf16.msra.mxu0 0
      %845 = vmatpush.bf16.msra.mxu0 0
      %846 = vmatpush.bf16.msra.mxu0 0
      %847 = vmatpush.bf16.msra.mxu0 0
      %848 = vmatpush.bf16.msra.mxu0 0
      %849 = vmatpush.bf16.msra.mxu0 0
      %850 = vmatpush.bf16.msra.mxu0 0
      %851 = vmatpush.bf16.msra.mxu0 %v830
      %852 = vmatmul.bf16.gmra.mxu0 %v833
      %v853 = vpop.f32.mrf.mxu0
      %v854 = vadd.f32 0.0, %v853
      %v855 = vpop.f32.mrf.mxu0
      %v856 = vadd.f32 0.0, %v855
      %857 = vmatmul.bf16.gmra.mxu0 %v836
      %v858 = vpop.f32.mrf.mxu0
      %v859 = vadd.f32 0.0, %v858
      %v860 = vpop.f32.mrf.mxu0
      %v861 = vadd.f32 0.0, %v860
      %862 = vmatmul.bf16.gmra.mxu0 %v839
      %v863 = vpop.f32.mrf.mxu0
      %v864 = vadd.f32 0.0, %v863
      %v865 = vpop.f32.mrf.mxu0
      %v866 = vadd.f32 0.0, %v865
      %867 = vmatmul.bf16.gmra.mxu0 %v842
      %v868 = vpop.f32.mrf.mxu0
      %v869 = vadd.f32 0.0, %v868
      %v870 = vpop.f32.mrf.mxu0
      %v871 = vadd.f32 0.0, %v870
      %872 = vdwg.mxu0
      %v873 = vadd.f32 %v811, %v854
      %v874 = vadd.f32 %v812, %v856
      %v875 = vadd.f32 %v813, %v859
      %v876 = vadd.f32 %v814, %v861
      %v877 = vadd.f32 %v815, %v864
      %v878 = vadd.f32 %v816, %v866
      %v879 = vadd.f32 %v817, %v869
      %v880 = vadd.f32 %v818, %v871
      %v883 = vrot.slane %v233, 1
      %v884 = vrot.slane %v234, 1
      %v885 = vsel %vm428, %v883, %v884
      %v887 = vpack.c.bf16 %v437, %v434
      %v888 = vpack.c.bf16 %v443, %v440
      %v889 = vpack.c.bf16 %v449, %v446
      %v890 = vpack.c.bf16 %v885, %v452
      %s891 = scalar_lea.vmem %s1, 64
      %v892 = vld [vmem:[%s891] sm:$0xf]
      %v893 = vld [vmem:[%s891 + $0x4] sm:$0xf]
      %v896 = vunpack.c.l.b16 %v892
      %v897 = vunpack.c.l.b16 %v893
      %v898 = vpack.c.b16 %v897, %v896
      %v901 = vsel %vm323, %v887, 0
      %v904 = vsel %vm323, %v888, 0
      %v907 = vsel %vm323, %v889, 0
      %v910 = vsel %vm323, %v890, 0
      %912 = vmatpush.bf16.msra.mxu0 0
      %913 = vmatpush.bf16.msra.mxu0 0
      %914 = vmatpush.bf16.msra.mxu0 0
      %915 = vmatpush.bf16.msra.mxu0 0
      %916 = vmatpush.bf16.msra.mxu0 0
      %917 = vmatpush.bf16.msra.mxu0 0
      %918 = vmatpush.bf16.msra.mxu0 0
      %919 = vmatpush.bf16.msra.mxu0 %v898
      %920 = vmatmul.bf16.gmra.mxu0 %v901
      %v921 = vpop.f32.mrf.mxu0
      %v922 = vadd.f32 0.0, %v921
      %v923 = vpop.f32.mrf.mxu0
      %v924 = vadd.f32 0.0, %v923
      %925 = vmatmul.bf16.gmra.mxu0 %v904
      %v926 = vpop.f32.mrf.mxu0
      %v927 = vadd.f32 0.0, %v926
      %v928 = vpop.f32.mrf.mxu0
      %v929 = vadd.f32 0.0, %v928
      %930 = vmatmul.bf16.gmra.mxu0 %v907
      %v931 = vpop.f32.mrf.mxu0
      %v932 = vadd.f32 0.0, %v931
      %v933 = vpop.f32.mrf.mxu0
      %v934 = vadd.f32 0.0, %v933
      %935 = vmatmul.bf16.gmra.mxu0 %v910
      %v936 = vpop.f32.mrf.mxu0
      %v937 = vadd.f32 0.0, %v936
      %v938 = vpop.f32.mrf.mxu0
      %v939 = vadd.f32 0.0, %v938
      %940 = vdwg.mxu0
      %v941 = vadd.f32 %v873, %v922
      %v942 = vadd.f32 %v874, %v924
      %v943 = vadd.f32 %v875, %v927
      %v944 = vadd.f32 %v876, %v929
      %v945 = vadd.f32 %v877, %v932
      %v946 = vadd.f32 %v878, %v934
      %v947 = vadd.f32 %v879, %v937
      %v948 = vadd.f32 %v880, %v939
      %v949 = vld [vmem:[%s2] sm:$0x1]
      %v951 = vperm.slane %v949, 0
      %v953 = vmul.f32 %v941, %v951
      %v954 = vmul.f32 %v942, %v951
      %v955 = vmul.f32 %v943, %v951
      %v956 = vmul.f32 %v944, %v951
      %v957 = vmul.f32 %v945, %v951
      %v958 = vmul.f32 %v946, %v951
      %v959 = vmul.f32 %v947, %v951
      %v960 = vmul.f32 %v948, %v951
      %v961 = vld [vmem:[%s3] sm:$0x1]
      %v963 = vperm.slane %v961, 0
      %v965 = vadd.f32 %v953, %v963
      %v966 = vadd.f32 %v954, %v963
      %v967 = vadd.f32 %v955, %v963
      %v968 = vadd.f32 %v956, %v963
      %v969 = vadd.f32 %v957, %v963
      %v970 = vadd.f32 %v958, %v963
      %v971 = vadd.f32 %v959, %v963
      %v972 = vadd.f32 %v960, %v963
      %v973 = vmax.f32 %v965, 0.0
      %v974 = vmax.f32 %v966, 0.0
      %v975 = vmax.f32 %v967, 0.0
      %v976 = vmax.f32 %v968, 0.0
      %v977 = vmax.f32 %v969, 0.0
      %v978 = vmax.f32 %v970, 0.0
      %v979 = vmax.f32 %v971, 0.0
      %v980 = vmax.f32 %v972, 0.0
      %v981 = vpack.c.bf16 %v973, %v973
      %v982 = vpack.c.bf16 %v974, %v974
      %v983 = vpack.c.bf16 %v975, %v975
      %v984 = vpack.c.bf16 %v976, %v976
      %v985 = vpack.c.bf16 %v977, %v977
      %v986 = vpack.c.bf16 %v978, %v978
      %v987 = vpack.c.bf16 %v979, %v979
      %v988 = vpack.c.bf16 %v980, %v980
      %vm989 = vcmask 257024
      %990 = vst.msk [vmem:[%s197] sm:$0xf] %vm989, %v981
      %991 = vst.msk [vmem:[%s197 + $0x4] sm:$0xf] %vm989, %v982
      %992 = vst.msk [vmem:[%s197 + $0x8] sm:$0xf] %vm989, %v983
      %993 = vst.msk [vmem:[%s197 + $0xc] sm:$0xf] %vm989, %v984
      %994 = vst.msk [vmem:[%s197 + $0x10] sm:$0xf] %vm989, %v985
      %995 = vst.msk [vmem:[%s197 + $0x14] sm:$0xf] %vm989, %v986
      %996 = vst.msk [vmem:[%s197 + $0x18] sm:$0xf] %vm989, %v987
      %997 = vst.msk [vmem:[%s197 + $0x1c] sm:$0xf] %vm989, %v988
      %p998 = scmp.lt.s32.totalorder %s15, 1
      %s999 = scalar_select %p998, %s15, 1
      %s1000 = smul.addr %s999, 8
      %s1001 = smul.addr %s1000, 4
      %s1002 = scalar_lea.vmem %s4, %s1001
      // Predicated region
      $region37: #{basic_block_forward.4} parent=35 // pred_check
        %p1003 = pneg %p122
      $region38: #{basic_block_forward.4} parent=35 // pred_check_branch
        %1005 = sbr.rel (%p1003) target = $region40
      $region39: #{basic_block_forward.4} parent=35 // pred_region
        _
      $region40: #{basic_block_forward.4} parent=35 // pred_fallthru
        _
    $region36: #{basic_block_forward.4} parent=5 // pred_fallthru
      _
    %p1006 = scmp.le.s32.totalorder 2, %s10
    // Predicated region
    $region41: #{basic_block_forward.4} parent=5 // pred_check
      %p1007 = pneg %p1006
    $region42: #{basic_block_forward.4} parent=5 // pred_check_branch
      %1009 = sbr.rel (%p1007) target = $region44
    $region43: #{basic_block_forward.4} parent=5 // pred_region
      %s1010 = ssub.s32 %s10, 2
      // Predicated region
      $region45: #{basic_block_forward.4} parent=43 // pred_check
        %p1011 = pneg %p128
      $region46: #{basic_block_forward.4} parent=43 // pred_check_branch
        %1013 = sbr.rel (%p1011) target = $region48
      $region47: #{basic_block_forward.4} parent=43 // pred_region
        %p1014 = scmp.lt.s32.totalorder %s16, 1
        %s1015 = scalar_select %p1014, %s16, 1
        %s1016 = smul.addr %s1015, 8
        %s1017 = smul.addr %s1016, 4
        %s1018 = scalar_lea.vmem %s4, %s1017
      $region48: #{basic_block_forward.4} parent=43 // pred_fallthru
        _
    $region44: #{basic_block_forward.4} parent=5 // pred_fallthru
      _
  $region6: #{basic_block_forward.4} parent=0 // loop_footer
    %s14 = sadd.s32 1, %s10
  $region7: #{basic_block_forward.4} parent=0 // loop_footer_branch
    %9 = sbr.rel target = $region3
  $region8: #{basic_block_forward.4} parent=0 // loop_exit
    _

// kernel: basic_block_forward.5
$region0: #{basic_block_forward.5}
  #allocation0 [shape = 'u32[]', space=smem, size = 0x4, offset = 0x4, fixed_abs, tag = 'smem constant byte address 0x4 - core index']
  #allocation1 [shape = 'u32[72,128]{1,0:T(1,128)}', space=vmem, size = 0x9000, scoped, tag = 'internal scratch']
  %s0 = inlined_call_operand.vmem [shape: bf16[2,1,10,10,32], index: 0, kind: input, shape index: {}]
  %s1 = inlined_call_operand.vmem [shape: bf16[9,32,32], index: 1, kind: input, shape index: {}]
  %s2 = inlined_call_operand.vmem [shape: f32[1,32], index: 2, kind: input, shape index: {}]
  %s3 = inlined_call_operand.vmem [shape: f32[1,32], index: 3, kind: input, shape index: {}]
  %s4 = inlined_call_operand.vmem [shape: bf16[2,64,32], index: 4, kind: output, shape index: {0}]
  %s5 = inlined_call_operand.vmem [shape: f32[2,1,32], index: 5, kind: output, shape index: {1}]
  %6 = xla_tuple %s4, %s5
  %s7 = sld [smem:[#allocation0]]
  $region57: #{basic_block_forward.5} parent=0
    _
  %s9 = ssub.s32 1, %s7
  %s10 = scalar_select 0, %s9, %s7
  loop: start=0, step=1, limit=4
  $region2: #{basic_block_forward.5} parent=0 // loop_pre_header
    _
  $region3: #{basic_block_forward.5} parent=0 // loop_header
    %s12 = sphi 0, %s16
    %p13 = scmp.ge.s32.totalorder %s12, 4
    %s22 = sphi 0, %s24
    %s25 = sphi 0, %s22
    %s26 = sphi 0, %s25
    %s42 = sphi 0, %s26
    %s46 = sphi 0, %s46
    %s48 = sphi 0, %s46
    %s49 = sphi 0, %s48
    %s63 = sphi 0, %s49
    %s67 = sphi 0, %s67
    %s69 = sphi 0, %s67
    %s70 = sphi 0, %s69
    %s84 = sphi 0, %s70
    %s88 = sphi 0, %s88
    %s90 = sphi 0, %s88
    %s91 = sphi 0, %s90
    %s105 = sphi 0, %s91
    %s111 = sphi 0, %s113
    %s114 = sphi 0, %s111
    %s115 = sphi 0, %s114
    %s131 = sphi 0, %s115
    %s137 = sphi 0, %s139
    %s140 = sphi 0, %s137
    %s141 = sphi 0, %s140
    %s157 = sphi 0, %s141
  $region4: #{basic_block_forward.5} parent=0 // loop_header_branch
    %15 = sbr.rel (%p13) target = $region8
  $region5: #{basic_block_forward.5} parent=0 // loop_body
    %s17 = ssub.s32 %s12, 1
    %s18 = ssub.s32 %s12, 2
    %s19 = sadd.s32 %s12, 1
    %s20 = ssub.s32 %s12, %s19
    %p21 = scmp.eq.s32.totalorder %s20, 0
    %s23 = sadd.s32 %s22, 1
    %s24 = scalar_select %p21, %s22, %s23
    %p27 = pneg %p21
    %p28 = scmp.eq.s32.totalorder %s12, 1
    %p29 = por %p27, %p28
    %p30 = scmp.ne.s32.totalorder %s22, %s25
    %p31 = scmp.eq.s32.totalorder %s12, 0
    %p32 = por %p30, %p31
    %p33 = scmp.ne.s32.totalorder %s22, %s25
    %p34 = scmp.eq.s32.totalorder %s17, 1
    %p35 = por %p33, %p34
    %p36 = scmp.ne.s32.totalorder %s25, %s26
    %p37 = scmp.eq.s32.totalorder %s17, 0
    %p38 = por %p36, %p37
    %p39 = scmp.ne.s32.totalorder %s25, %s26
    %p40 = scmp.eq.s32.totalorder %s18, 1
    %p41 = por %p39, %p40
    %p43 = scmp.ne.s32.totalorder %s26, %s42
    %p44 = scmp.eq.s32.totalorder %s18, 0
    %p45 = por %p43, %p44
    %s47 = sadd.s32 %s46, 1
    %p50 = scmp.eq.s32.totalorder %s12, 1
    %p51 = scmp.ne.s32.totalorder %s46, %s48
    %p52 = scmp.eq.s32.totalorder %s12, 0
    %p53 = por %p51, %p52
    %p54 = scmp.ne.s32.totalorder %s46, %s48
    %p55 = scmp.eq.s32.totalorder %s17, 1
    %p56 = por %p54, %p55
    %p57 = scmp.ne.s32.totalorder %s48, %s49
    %p58 = scmp.eq.s32.totalorder %s17, 0
    %p59 = por %p57, %p58
    %p60 = scmp.ne.s32.totalorder %s48, %s49
    %p61 = scmp.eq.s32.totalorder %s18, 1
    %p62 = por %p60, %p61
    %p64 = scmp.ne.s32.totalorder %s49, %s63
    %p65 = scmp.eq.s32.totalorder %s18, 0
    %p66 = por %p64, %p65
    %s68 = sadd.s32 %s67, 1
    %p71 = scmp.eq.s32.totalorder %s12, 1
    %p72 = scmp.ne.s32.totalorder %s67, %s69
    %p73 = scmp.eq.s32.totalorder %s12, 0
    %p74 = por %p72, %p73
    %p75 = scmp.ne.s32.totalorder %s67, %s69
    %p76 = scmp.eq.s32.totalorder %s17, 1
    %p77 = por %p75, %p76
    %p78 = scmp.ne.s32.totalorder %s69, %s70
    %p79 = scmp.eq.s32.totalorder %s17, 0
    %p80 = por %p78, %p79
    %p81 = scmp.ne.s32.totalorder %s69, %s70
    %p82 = scmp.eq.s32.totalorder %s18, 1
    %p83 = por %p81, %p82
    %p85 = scmp.ne.s32.totalorder %s70, %s84
    %p86 = scmp.eq.s32.totalorder %s18, 0
    %p87 = por %p85, %p86
    %s89 = sadd.s32 %s88, 1
    %p92 = scmp.eq.s32.totalorder %s12, 1
    %p93 = scmp.ne.s32.totalorder %s88, %s90
    %p94 = scmp.eq.s32.totalorder %s12, 0
    %p95 = por %p93, %p94
    %p96 = scmp.ne.s32.totalorder %s88, %s90
    %p97 = scmp.eq.s32.totalorder %s17, 1
    %p98 = por %p96, %p97
    %p99 = scmp.ne.s32.totalorder %s90, %s91
    %p100 = scmp.eq.s32.totalorder %s17, 0
    %p101 = por %p99, %p100
    %p102 = scmp.ne.s32.totalorder %s90, %s91
    %p103 = scmp.eq.s32.totalorder %s18, 1
    %p104 = por %p102, %p103
    %p106 = scmp.ne.s32.totalorder %s91, %s105
    %p107 = scmp.eq.s32.totalorder %s18, 0
    %p108 = por %p106, %p107
    %s109 = ssub.s32 %s12, %s19
    %p110 = scmp.eq.s32.totalorder %s109, 0
    %s112 = sadd.s32 %s111, 1
    %s113 = scalar_select %p110, %s111, %s112
    %p116 = pneg %p110
    %p117 = scmp.eq.s32.totalorder %s12, 1
    %p118 = por %p116, %p117
    %p119 = scmp.ne.s32.totalorder %s111, %s114
    %p120 = scmp.eq.s32.totalorder %s12, 0
    %p121 = por %p119, %p120
    %p122 = scmp.ne.s32.totalorder %s111, %s114
    %p123 = scmp.eq.s32.totalorder %s17, 1
    %p124 = por %p122, %p123
    %p125 = scmp.ne.s32.totalorder %s114, %s115
    %p126 = scmp.eq.s32.totalorder %s17, 0
    %p127 = por %p125, %p126
    %p128 = scmp.ne.s32.totalorder %s114, %s115
    %p129 = scmp.eq.s32.totalorder %s18, 1
    %p130 = por %p128, %p129
    %p132 = scmp.ne.s32.totalorder %s115, %s131
    %p133 = scmp.eq.s32.totalorder %s18, 0
    %p134 = por %p132, %p133
    %s135 = ssub.s32 %s12, %s19
    %p136 = scmp.eq.s32.totalorder %s135, 0
    %s138 = sadd.s32 %s137, 1
    %s139 = scalar_select %p136, %s137, %s138
    %p142 = pneg %p136
    %p143 = scmp.eq.s32.totalorder %s12, 1
    %p144 = por %p142, %p143
    %p145 = scmp.ne.s32.totalorder %s137, %s140
    %p146 = scmp.eq.s32.totalorder %s12, 0
    %p147 = por %p145, %p146
    %p148 = scmp.ne.s32.totalorder %s137, %s140
    %p149 = scmp.eq.s32.totalorder %s17, 1
    %p150 = por %p148, %p149
    %p151 = scmp.ne.s32.totalorder %s140, %s141
    %p152 = scmp.eq.s32.totalorder %s17, 0
    %p153 = por %p151, %p152
    %p154 = scmp.ne.s32.totalorder %s140, %s141
    %p155 = scmp.eq.s32.totalorder %s18, 1
    %p156 = por %p154, %p155
    %p158 = scmp.ne.s32.totalorder %s141, %s157
    %p159 = scmp.eq.s32.totalorder %s18, 0
    %p160 = por %p158, %p159
    %p161 = scmp.le.s32.totalorder 1, %s12
    %p162 = scmp.lt.s32.totalorder %s12, 3
    %p163 = pnand %p161, %p162
    %p164 = pneg %p163
    // Predicated region
    $region9: #{basic_block_forward.5} parent=5 // pred_check
      _
    $region10: #{basic_block_forward.5} parent=5 // pred_check_branch
      %166 = sbr.rel (%p163) target = $region12
    $region11: #{basic_block_forward.5} parent=5 // pred_region
      %s167 = ssub.s32 %s12, 1
      // Predicated region
      $region13: #{basic_block_forward.5} parent=11 // pred_check
        %p168 = pneg %p59
      $region14: #{basic_block_forward.5} parent=11 // pred_check_branch
        %170 = sbr.rel (%p168) target = $region16
      $region15: #{basic_block_forward.5} parent=11 // pred_region
        _
      $region16: #{basic_block_forward.5} parent=11 // pred_fallthru
        _
      // Predicated region
      $region17: #{basic_block_forward.5} parent=11 // pred_check
        %p171 = pneg %p80
      $region18: #{basic_block_forward.5} parent=11 // pred_check_branch
        %173 = sbr.rel (%p171) target = $region20
      $region19: #{basic_block_forward.5} parent=11 // pred_region
        _
      $region20: #{basic_block_forward.5} parent=11 // pred_fallthru
        _
      // Predicated region
      $region21: #{basic_block_forward.5} parent=11 // pred_check
        %p174 = pneg %p101
      $region22: #{basic_block_forward.5} parent=11 // pred_check_branch
        %176 = sbr.rel (%p174) target = $region24
      $region23: #{basic_block_forward.5} parent=11 // pred_region
        _
      $region24: #{basic_block_forward.5} parent=11 // pred_fallthru
        _
    $region12: #{basic_block_forward.5} parent=5 // pred_fallthru
      _
    %p177 = scmp.lt.s32.totalorder %s12, 2
    // Predicated region
    $region25: #{basic_block_forward.5} parent=5 // pred_check
      %p178 = pneg %p177
    $region26: #{basic_block_forward.5} parent=5 // pred_check_branch
      %180 = sbr.rel (%p178) target = $region28
    $region27: #{basic_block_forward.5} parent=5 // pred_region
      // Predicated region
      $region29: #{basic_block_forward.5} parent=27 // pred_check
        %p181 = pneg %p32
      $region30: #{basic_block_forward.5} parent=27 // pred_check_branch
        %183 = sbr.rel (%p181) target = $region32
      $region31: #{basic_block_forward.5} parent=27 // pred_region
        %p184 = scmp.lt.s32.totalorder %s12, 1
        %s185 = scalar_select %p184, %s12, 1
        %s186 = smul.addr %s185, 20
        %s187 = smul.addr %s186, 4
        %s188 = scalar_lea.vmem %s0, %s187
      $region32: #{basic_block_forward.5} parent=27 // pred_fallthru
        _
    $region28: #{basic_block_forward.5} parent=5 // pred_fallthru
      _
    %p189 = scmp.le.s32.totalorder 1, %s12
    %p190 = scmp.lt.s32.totalorder %s12, 3
    %p191 = pnand %p189, %p190
    %p192 = pneg %p191
    // Predicated region
    $region33: #{basic_block_forward.5} parent=5 // pred_check
      _
    $region34: #{basic_block_forward.5} parent=5 // pred_check_branch
      %194 = sbr.rel (%p191) target = $region36
    $region35: #{basic_block_forward.5} parent=5 // pred_region
      %s195 = ssub.s32 %s12, 1
      %p196 = scmp.lt.s32.totalorder %s17, 1
      %s197 = scalar_select %p196, %s17, 1
      %s198 = smul.addr %s197, 20
      %s199 = smul.addr %s198, 4
      %s200 = scalar_lea.vmem %s0, %s199
      %p201 = pneg %p38
      %p202 = pneg %p35
      %p203 = pneg %p59
      %p204 = pneg %p56
      %p205 = pneg %p80
      %p206 = pneg %p77
      %p207 = pneg %p101
      %p208 = pneg %p98
      %p209 = pneg %p127
      %p210 = pneg %p124
      %p211 = scmp.lt.s32.totalorder %s17, 1
      %s212 = scalar_select %p211, %s17, 1
      %s213 = smul.addr %s212, 8
      %s214 = smul.addr %s213, 4
      %s215 = scalar_lea.vmem %s4, %s214
      %p216 = pneg %p153
      %p217 = pneg %p150
      %p218 = scmp.lt.s32.totalorder %s17, 1
      %s219 = scalar_select %p218, %s17, 1
      %s220 = scalar_lea.vmem %s5, %s219
      %p221 = scmp.lt.s32.totalorder %s17, 1
      %s222 = scalar_select %p221, %s17, 1
      %s223 = smul.addr %s222, 20
      %s224 = smul.addr %s223, 4
      %s225 = scalar_lea.vmem %s0, %s224
      %p226 = scmp.lt.s32.totalorder %s17, 1
      %s227 = scalar_select %p226, %s17, 1
      %s228 = smul.addr %s227, 8
      %s229 = smul.addr %s228, 4
      %s230 = scalar_lea.vmem %s4, %s229
      %p231 = scmp.lt.s32.totalorder %s17, 1
      %s232 = scalar_select %p231, %s17, 1
      %s233 = scalar_lea.vmem %s5, %s232
      %v235 = vld [vmem:[%s225] sm:$0xf]
      %v236 = vld [vmem:[%s225 + $0x4] sm:$0x1]
      %v237 = vld [vmem:[%s225 + $0x8] sm:$0xf]
      %v238 = vld [vmem:[%s225 + $0xc] sm:$0x1]
      %v239 = vld [vmem:[%s225 + $0x10] sm:$0xf]
      %v240 = vld [vmem:[%s225 + $0x14] sm:$0x1]
      %v241 = vld [vmem:[%s225 + $0x18] sm:$0xf]
      %v242 = vld [vmem:[%s225 + $0x1c] sm:$0x1]
      %v243 = vld [vmem:[%s225 + $0x20] sm:$0xf]
      %v244 = vld [vmem:[%s225 + $0x24] sm:$0x1]
      %v245 = vld [vmem:[%s225 + $0x28] sm:$0xf]
      %v246 = vld [vmem:[%s225 + $0x2c] sm:$0x1]
      %v247 = vld [vmem:[%s225 + $0x30] sm:$0xf]
      %v248 = vld [vmem:[%s225 + $0x34] sm:$0x1]
      %v249 = vld [vmem:[%s225 + $0x38] sm:$0xf]
      %v250 = vld [vmem:[%s225 + $0x3c] sm:$0x1]
      %v251 = vld [vmem:[%s225 + $0x40] sm:$0xf]
      %v252 = vld [vmem:[%s225 + $0x44] sm:$0x1]
      %v253 = vld [vmem:[%s225 + $0x48] sm:$0xf]
      %v254 = vld [vmem:[%s225 + $0x4c] sm:$0x1]
      %v255 = vunpack.c.l.bf16 %v235
      %v256 = vunpack.c.l.bf16 %v236
      %v257 = vunpack.c.l.bf16 %v237
      %v258 = vunpack.c.l.bf16 %v238
      %v259 = vunpack.c.l.bf16 %v239
      %v260 = vunpack.c.l.bf16 %v240
      %v261 = vunpack.c.l.bf16 %v241
      %v262 = vunpack.c.l.bf16 %v242
      %v263 = vunpack.c.l.bf16 %v243
      %v264 = vunpack.c.l.bf16 %v244
      %v265 = vunpack.c.l.bf16 %v245
      %v266 = vunpack.c.l.bf16 %v246
      %v267 = vunpack.c.l.bf16 %v247
      %v268 = vunpack.c.l.bf16 %v248
      %v269 = vunpack.c.l.bf16 %v249
      %v270 = vunpack.c.l.bf16 %v250
      %v271 = vunpack.c.l.bf16 %v251
      %v272 = vunpack.c.l.bf16 %v252
      %v273 = vunpack.c.l.bf16 %v253
      %v274 = vunpack.c.l.bf16 %v254
      %v275 = vpack.c.bf16 %v257, %v255
      %v276 = vpack.c.bf16 %v261, %v259
      %v277 = vpack.c.bf16 %v265, %v263
      %v278 = vpack.c.bf16 %v269, %v267
      %v279 = vld [vmem:[%s1] sm:$0xf]
      %v280 = vld [vmem:[%s1 + $0x4] sm:$0xf]
      %v281 = vld [vmem:[%s1 + $0x8] sm:$0xf]
      %v282 = vld [vmem:[%s1 + $0xc] sm:$0xf]
      %vm299 = vcmask 1046528
      %v300 = vrot.slane %v255, 1
      %v301 = vrot.slane %v256, 1
      %v302 = vsel %vm299, %v300, %v301
      %v303 = vrot.slane %v257, 1
      %v304 = vrot.slane %v258, 1
      %v305 = vsel %vm299, %v303, %v304
      %v306 = vrot.slane %v259, 1
      %v307 = vrot.slane %v260, 1
      %v308 = vsel %vm299, %v306, %v307
      %v309 = vrot.slane %v261, 1
      %v310 = vrot.slane %v262, 1
      %v311 = vsel %vm299, %v309, %v310
      %v312 = vrot.slane %v263, 1
      %v313 = vrot.slane %v264, 1
      %v314 = vsel %vm299, %v312, %v313
      %v315 = vrot.slane %v265, 1
      %v316 = vrot.slane %v266, 1
      %v317 = vsel %vm299, %v315, %v316
      %v318 = vrot.slane %v267, 1
      %v319 = vrot.slane %v268, 1
      %v320 = vsel %vm299, %v318, %v319
      %v321 = vrot.slane %v269, 1
      %v322 = vrot.slane %v270, 1
      %v323 = vsel %vm299, %v321, %v322
      %v332 = vpack.c.bf16 %v305, %v302
      %v333 = vpack.c.bf16 %v311, %v308
      %v334 = vpack.c.bf16 %v317, %v314
      %v335 = vpack.c.bf16 %v323, %v320
      %s336 = scalar_lea.vmem %s1, 16
      %v337 = vld [vmem:[%s336] sm:$0xf]
      %v338 = vld [vmem:[%s336 + $0x4] sm:$0xf]
      %v339 = vld [vmem:[%s336 + $0x8] sm:$0xf]
      %v340 = vld [vmem:[%s336 + $0xc] sm:$0xf]
      %v345 = vunpack.c.l.b16 %v337
      %v346 = vunpack.c.l.b16 %v338
      %v347 = vunpack.c.l.b16 %v339
      %v348 = vunpack.c.l.b16 %v340
      %v349 = vpack.c.b16 %v346, %v345
      %v350 = vpack.c.b16 %v348, %v347
      %vm353 = vcmask 261120
      %v355 = vsel %vm353, %v332, 0
      %v358 = vsel %vm353, %v333, 0
      %v361 = vsel %vm353, %v334, 0
      %v364 = vsel %vm353, %v335, 0
      %366 = vmatpush.bf16.msra.mxu0 0
      %367 = vmatpush.bf16.msra.mxu0 0
      %368 = vmatpush.bf16.msra.mxu0 0
      %369 = vmatpush.bf16.msra.mxu0 0
      %370 = vmatpush.bf16.msra.mxu0 0
      %371 = vmatpush.bf16.msra.mxu0 0
      %372 = vmatpush.bf16.msra.mxu0 %v350
      %373 = vmatpush.bf16.msra.mxu0 %v349
      %374 = vmatmul.bf16.gmra.mxu0 %v355
      %v375 = vpop.f32.mrf.mxu0
      %v376 = vadd.f32 0.0, %v375
      %v377 = vpop.f32.mrf.mxu0
      %v378 = vadd.f32 0.0, %v377
      %379 = vmatmul.bf16.gmra.mxu0 %v358
      %v380 = vpop.f32.mrf.mxu0
      %v381 = vadd.f32 0.0, %v380
      %v382 = vpop.f32.mrf.mxu0
      %v383 = vadd.f32 0.0, %v382
      %384 = vmatmul.bf16.gmra.mxu0 %v361
      %v385 = vpop.f32.mrf.mxu0
      %v386 = vadd.f32 0.0, %v385
      %v387 = vpop.f32.mrf.mxu0
      %v388 = vadd.f32 0.0, %v387
      %389 = vmatmul.bf16.gmra.mxu0 %v364
      %v390 = vpop.f32.mrf.mxu0
      %v391 = vadd.f32 0.0, %v390
      %v392 = vpop.f32.mrf.mxu0
      %v393 = vadd.f32 0.0, %v392
      %394 = vdwg.mxu0
      %v399 = vunpack.c.l.b16 %v279
      %v400 = vunpack.c.l.b16 %v280
      %v401 = vunpack.c.l.b16 %v281
      %v402 = vunpack.c.l.b16 %v282
      %v403 = vpack.c.b16 %v400, %v399
      %v404 = vpack.c.b16 %v402, %v401
      %v408 = vsel %vm353, %v275, 0
      %v411 = vsel %vm353, %v276, 0
      %v414 = vsel %vm353, %v277, 0
      %v417 = vsel %vm353, %v278, 0
      %419 = vmatpush.bf16.msra.mxu0 0
      %420 = vmatpush.bf16.msra.mxu0 0
      %421 = vmatpush.bf16.msra.mxu0 0
      %422 = vmatpush.bf16.msra.mxu0 0
      %423 = vmatpush.bf16.msra.mxu0 0
      %424 = vmatpush.bf16.msra.mxu0 0
      %425 = vmatpush.bf16.msra.mxu0 %v404
      %426 = vmatpush.bf16.msra.mxu0 %v403
      %427 = vmatmul.bf16.gmra.mxu0 %v408
      %v428 = vpop.f32.mrf.mxu0
      %v429 = vadd.f32 %v376, %v428
      %v430 = vpop.f32.mrf.mxu0
      %v431 = vadd.f32 %v378, %v430
      %432 = vmatmul.bf16.gmra.mxu0 %v411
      %v433 = vpop.f32.mrf.mxu0
      %v434 = vadd.f32 %v381, %v433
      %v435 = vpop.f32.mrf.mxu0
      %v436 = vadd.f32 %v383, %v435
      %437 = vmatmul.bf16.gmra.mxu0 %v414
      %v438 = vpop.f32.mrf.mxu0
      %v439 = vadd.f32 %v386, %v438
      %v440 = vpop.f32.mrf.mxu0
      %v441 = vadd.f32 %v388, %v440
      %442 = vmatmul.bf16.gmra.mxu0 %v417
      %v443 = vpop.f32.mrf.mxu0
      %v444 = vadd.f32 %v391, %v443
      %v445 = vpop.f32.mrf.mxu0
      %v446 = vadd.f32 %v393, %v445
      %447 = vdwg.mxu0
      %vm448 = vcmask 1045504
      %v449 = vrot.slane %v255, 2
      %v450 = vrot.slane %v256, 2
      %v451 = vsel %vm448, %v449, %v450
      %v452 = vrot.slane %v257, 2
      %v453 = vrot.slane %v258, 2
      %v454 = vsel %vm448, %v452, %v453
      %v455 = vrot.slane %v259, 2
      %v456 = vrot.slane %v260, 2
      %v457 = vsel %vm448, %v455, %v456
      %v458 = vrot.slane %v261, 2
      %v459 = vrot.slane %v262, 2
      %v460 = vsel %vm448, %v458, %v459
      %v461 = vrot.slane %v263, 2
      %v462 = vrot.slane %v264, 2
      %v463 = vsel %vm448, %v461, %v462
      %v464 = vrot.slane %v265, 2
      %v465 = vrot.slane %v266, 2
      %v466 = vsel %vm448, %v464, %v465
      %v467 = vrot.slane %v267, 2
      %v468 = vrot.slane %v268, 2
      %v469 = vsel %vm448, %v467, %v468
      %v470 = vrot.slane %v269, 2
      %v471 = vrot.slane %v270, 2
      %v472 = vsel %vm448, %v470, %v471
      %v481 = vpack.c.bf16 %v454, %v451
      %v482 = vpack.c.bf16 %v460, %v457
      %v483 = vpack.c.bf16 %v466, %v463
      %v484 = vpack.c.bf16 %v472, %v469
      %s485 = scalar_lea.vmem %s1, 32
      %v486 = vld [vmem:[%s485] sm:$0xf]
      %v487 = vld [vmem:[%s485 + $0x4] sm:$0xf]
      %v488 = vld [vmem:[%s485 + $0x8] sm:$0xf]
      %v489 = vld [vmem:[%s485 + $0xc] sm:$0xf]
      %v494 = vunpack.c.l.b16 %v486
      %v495 = vunpack.c.l.b16 %v487
      %v496 = vunpack.c.l.b16 %v488
      %v497 = vunpack.c.l.b16 %v489
      %v498 = vpack.c.b16 %v495, %v494
      %v499 = vpack.c.b16 %v497, %v496
      %v503 = vsel %vm353, %v481, 0
      %v506 = vsel %vm353, %v482, 0
      %v509 = vsel %vm353, %v483, 0
      %v512 = vsel %vm353, %v484, 0
      %514 = vmatpush.bf16.msra.mxu0 0
      %515 = vmatpush.bf16.msra.mxu0 0
      %516 = vmatpush.bf16.msra.mxu0 0
      %517 = vmatpush.bf16.msra.mxu0 0
      %518 = vmatpush.bf16.msra.mxu0 0
      %519 = vmatpush.bf16.msra.mxu0 0
      %520 = vmatpush.bf16.msra.mxu0 %v499
      %521 = vmatpush.bf16.msra.mxu0 %v498
      %522 = vmatmul.bf16.gmra.mxu0 %v503
      %v523 = vpop.f32.mrf.mxu0
      %v524 = vadd.f32 0.0, %v523
      %v525 = vpop.f32.mrf.mxu0
      %v526 = vadd.f32 0.0, %v525
      %527 = vmatmul.bf16.gmra.mxu0 %v506
      %v528 = vpop.f32.mrf.mxu0
      %v529 = vadd.f32 0.0, %v528
      %v530 = vpop.f32.mrf.mxu0
      %v531 = vadd.f32 0.0, %v530
      %532 = vmatmul.bf16.gmra.mxu0 %v509
      %v533 = vpop.f32.mrf.mxu0
      %v534 = vadd.f32 0.0, %v533
      %v535 = vpop.f32.mrf.mxu0
      %v536 = vadd.f32 0.0, %v535
      %537 = vmatmul.bf16.gmra.mxu0 %v512
      %v538 = vpop.f32.mrf.mxu0
      %v539 = vadd.f32 0.0, %v538
      %v540 = vpop.f32.mrf.mxu0
      %v541 = vadd.f32 0.0, %v540
      %542 = vdwg.mxu0
      %v543 = vadd.f32 %v429, %v524
      %v544 = vadd.f32 %v431, %v526
      %v545 = vadd.f32 %v434, %v529
      %v546 = vadd.f32 %v436, %v531
      %v547 = vadd.f32 %v439, %v534
      %v548 = vadd.f32 %v441, %v536
      %v549 = vadd.f32 %v444, %v539
      %v550 = vadd.f32 %v446, %v541
      %v551 = vpack.c.bf16 %v259, %v257
      %v552 = vpack.c.bf16 %v263, %v261
      %v553 = vpack.c.bf16 %v267, %v265
      %v554 = vpack.c.bf16 %v271, %v269
      %s555 = scalar_lea.vmem %s1, 48
      %v556 = vld [vmem:[%s555] sm:$0xf]
      %v557 = vld [vmem:[%s555 + $0x4] sm:$0xf]
      %v558 = vld [vmem:[%s555 + $0x8] sm:$0xf]
      %v559 = vld [vmem:[%s555 + $0xc] sm:$0xf]
      %v564 = vunpack.c.l.b16 %v556
      %v565 = vunpack.c.l.b16 %v557
      %v566 = vunpack.c.l.b16 %v558
      %v567 = vunpack.c.l.b16 %v559
      %v568 = vpack.c.b16 %v565, %v564
      %v569 = vpack.c.b16 %v567, %v566
      %v573 = vsel %vm353, %v551, 0
      %v576 = vsel %vm353, %v552, 0
      %v579 = vsel %vm353, %v553, 0
      %v582 = vsel %vm353, %v554, 0
      %584 = vmatpush.bf16.msra.mxu0 0
      %585 = vmatpush.bf16.msra.mxu0 0
      %586 = vmatpush.bf16.msra.mxu0 0
      %587 = vmatpush.bf16.msra.mxu0 0
      %588 = vmatpush.bf16.msra.mxu0 0
      %589 = vmatpush.bf16.msra.mxu0 0
      %590 = vmatpush.bf16.msra.mxu0 %v569
      %591 = vmatpush.bf16.msra.mxu0 %v568
      %592 = vmatmul.bf16.gmra.mxu0 %v573
      %v593 = vpop.f32.mrf.mxu0
      %v594 = vadd.f32 0.0, %v593
      %v595 = vpop.f32.mrf.mxu0
      %v596 = vadd.f32 0.0, %v595
      %597 = vmatmul.bf16.gmra.mxu0 %v576
      %v598 = vpop.f32.mrf.mxu0
      %v599 = vadd.f32 0.0, %v598
      %v600 = vpop.f32.mrf.mxu0
      %v601 = vadd.f32 0.0, %v600
      %602 = vmatmul.bf16.gmra.mxu0 %v579
      %v603 = vpop.f32.mrf.mxu0
      %v604 = vadd.f32 0.0, %v603
      %v605 = vpop.f32.mrf.mxu0
      %v606 = vadd.f32 0.0, %v605
      %607 = vmatmul.bf16.gmra.mxu0 %v582
      %v608 = vpop.f32.mrf.mxu0
      %v609 = vadd.f32 0.0, %v608
      %v610 = vpop.f32.mrf.mxu0
      %v611 = vadd.f32 0.0, %v610
      %612 = vdwg.mxu0
      %v613 = vadd.f32 %v543, %v594
      %v614 = vadd.f32 %v544, %v596
      %v615 = vadd.f32 %v545, %v599
      %v616 = vadd.f32 %v546, %v601
      %v617 = vadd.f32 %v547, %v604
      %v618 = vadd.f32 %v548, %v606
      %v619 = vadd.f32 %v549, %v609
      %v620 = vadd.f32 %v550, %v611
      %v623 = vrot.slane %v271, 1
      %v624 = vrot.slane %v272, 1
      %v625 = vsel %vm299, %v623, %v624
      %v627 = vpack.c.bf16 %v308, %v305
      %v628 = vpack.c.bf16 %v314, %v311
      %v629 = vpack.c.bf16 %v320, %v317
      %v630 = vpack.c.bf16 %v625, %v323
      %s631 = scalar_lea.vmem %s1, 64
      %v632 = vld [vmem:[%s631] sm:$0xf]
      %v633 = vld [vmem:[%s631 + $0x4] sm:$0xf]
      %v634 = vld [vmem:[%s631 + $0x8] sm:$0xf]
      %v635 = vld [vmem:[%s631 + $0xc] sm:$0xf]
      %v640 = vunpack.c.l.b16 %v632
      %v641 = vunpack.c.l.b16 %v633
      %v642 = vunpack.c.l.b16 %v634
      %v643 = vunpack.c.l.b16 %v635
      %v644 = vpack.c.b16 %v641, %v640
      %v645 = vpack.c.b16 %v643, %v642
      %v649 = vsel %vm353, %v627, 0
      %v652 = vsel %vm353, %v628, 0
      %v655 = vsel %vm353, %v629, 0
      %v658 = vsel %vm353, %v630, 0
      %660 = vmatpush.bf16.msra.mxu0 0
      %661 = vmatpush.bf16.msra.mxu0 0
      %662 = vmatpush.bf16.msra.mxu0 0
      %663 = vmatpush.bf16.msra.mxu0 0
      %664 = vmatpush.bf16.msra.mxu0 0
      %665 = vmatpush.bf16.msra.mxu0 0
      %666 = vmatpush.bf16.msra.mxu0 %v645
      %667 = vmatpush.bf16.msra.mxu0 %v644
      %668 = vmatmul.bf16.gmra.mxu0 %v649
      %v669 = vpop.f32.mrf.mxu0
      %v670 = vadd.f32 0.0, %v669
      %v671 = vpop.f32.mrf.mxu0
      %v672 = vadd.f32 0.0, %v671
      %673 = vmatmul.bf16.gmra.mxu0 %v652
      %v674 = vpop.f32.mrf.mxu0
      %v675 = vadd.f32 0.0, %v674
      %v676 = vpop.f32.mrf.mxu0
      %v677 = vadd.f32 0.0, %v676
      %678 = vmatmul.bf16.gmra.mxu0 %v655
      %v679 = vpop.f32.mrf.mxu0
      %v680 = vadd.f32 0.0, %v679
      %v681 = vpop.f32.mrf.mxu0
      %v682 = vadd.f32 0.0, %v681
      %683 = vmatmul.bf16.gmra.mxu0 %v658
      %v684 = vpop.f32.mrf.mxu0
      %v685 = vadd.f32 0.0, %v684
      %v686 = vpop.f32.mrf.mxu0
      %v687 = vadd.f32 0.0, %v686
      %688 = vdwg.mxu0
      %v689 = vadd.f32 %v613, %v670
      %v690 = vadd.f32 %v614, %v672
      %v691 = vadd.f32 %v615, %v675
      %v692 = vadd.f32 %v616, %v677
      %v693 = vadd.f32 %v617, %v680
      %v694 = vadd.f32 %v618, %v682
      %v695 = vadd.f32 %v619, %v685
      %v696 = vadd.f32 %v620, %v687
      %v697 = vrot.slane %v271, 2
      %v698 = vrot.slane %v272, 2
      %v699 = vsel %vm448, %v697, %v698
      %v701 = vpack.c.bf16 %v457, %v454
      %v702 = vpack.c.bf16 %v463, %v460
      %v703 = vpack.c.bf16 %v469, %v466
      %v704 = vpack.c.bf16 %v699, %v472
      %s705 = scalar_lea.vmem %s1, 80
      %v706 = vld [vmem:[%s705] sm:$0xf]
      %v707 = vld [vmem:[%s705 + $0x4] sm:$0xf]
      %v708 = vld [vmem:[%s705 + $0x8] sm:$0xf]
      %v709 = vld [vmem:[%s705 + $0xc] sm:$0xf]
      %v714 = vunpack.c.l.b16 %v706
      %v715 = vunpack.c.l.b16 %v707
      %v716 = vunpack.c.l.b16 %v708
      %v717 = vunpack.c.l.b16 %v709
      %v718 = vpack.c.b16 %v715, %v714
      %v719 = vpack.c.b16 %v717, %v716
      %v723 = vsel %vm353, %v701, 0
      %v726 = vsel %vm353, %v702, 0
      %v729 = vsel %vm353, %v703, 0
      %v732 = vsel %vm353, %v704, 0
      %734 = vmatpush.bf16.msra.mxu0 0
      %735 = vmatpush.bf16.msra.mxu0 0
      %736 = vmatpush.bf16.msra.mxu0 0
      %737 = vmatpush.bf16.msra.mxu0 0
      %738 = vmatpush.bf16.msra.mxu0 0
      %739 = vmatpush.bf16.msra.mxu0 0
      %740 = vmatpush.bf16.msra.mxu0 %v719
      %741 = vmatpush.bf16.msra.mxu0 %v718
      %742 = vmatmul.bf16.gmra.mxu0 %v723
      %v743 = vpop.f32.mrf.mxu0
      %v744 = vadd.f32 0.0, %v743
      %v745 = vpop.f32.mrf.mxu0
      %v746 = vadd.f32 0.0, %v745
      %747 = vmatmul.bf16.gmra.mxu0 %v726
      %v748 = vpop.f32.mrf.mxu0
      %v749 = vadd.f32 0.0, %v748
      %v750 = vpop.f32.mrf.mxu0
      %v751 = vadd.f32 0.0, %v750
      %752 = vmatmul.bf16.gmra.mxu0 %v729
      %v753 = vpop.f32.mrf.mxu0
      %v754 = vadd.f32 0.0, %v753
      %v755 = vpop.f32.mrf.mxu0
      %v756 = vadd.f32 0.0, %v755
      %757 = vmatmul.bf16.gmra.mxu0 %v732
      %v758 = vpop.f32.mrf.mxu0
      %v759 = vadd.f32 0.0, %v758
      %v760 = vpop.f32.mrf.mxu0
      %v761 = vadd.f32 0.0, %v760
      %762 = vdwg.mxu0
      %v763 = vadd.f32 %v689, %v744
      %v764 = vadd.f32 %v690, %v746
      %v765 = vadd.f32 %v691, %v749
      %v766 = vadd.f32 %v692, %v751
      %v767 = vadd.f32 %v693, %v754
      %v768 = vadd.f32 %v694, %v756
      %v769 = vadd.f32 %v695, %v759
      %v770 = vadd.f32 %v696, %v761
      %v771 = vpack.c.bf16 %v273, %v271
      %s772 = scalar_lea.vmem %s1, 96
      %v773 = vld [vmem:[%s772] sm:$0xf]
      %v774 = vld [vmem:[%s772 + $0x4] sm:$0xf]
      %v775 = vld [vmem:[%s772 + $0x8] sm:$0xf]
      %v776 = vld [vmem:[%s772 + $0xc] sm:$0xf]
      %v781 = vunpack.c.l.b16 %v773
      %v782 = vunpack.c.l.b16 %v774
      %v783 = vunpack.c.l.b16 %v775
      %v784 = vunpack.c.l.b16 %v776
      %v785 = vpack.c.b16 %v782, %v781
      %v786 = vpack.c.b16 %v784, %v783
      %v790 = vsel %vm353, %v771, 0
      %792 = vmatpush.bf16.msra.mxu0 0
      %793 = vmatpush.bf16.msra.mxu0 0
      %794 = vmatpush.bf16.msra.mxu0 0
      %795 = vmatpush.bf16.msra.mxu0 0
      %796 = vmatpush.bf16.msra.mxu0 0
      %797 = vmatpush.bf16.msra.mxu0 0
      %798 = vmatpush.bf16.msra.mxu0 %v786
      %799 = vmatpush.bf16.msra.mxu0 %v785
      %800 = vmatmul.bf16.gmra.mxu0 %v411
      %v801 = vpop.f32.mrf.mxu0
      %v802 = vadd.f32 0.0, %v801
      %v803 = vpop.f32.mrf.mxu0
      %v804 = vadd.f32 0.0, %v803
      %805 = vmatmul.bf16.gmra.mxu0 %v414
      %v806 = vpop.f32.mrf.mxu0
      %v807 = vadd.f32 0.0, %v806
      %v808 = vpop.f32.mrf.mxu0
      %v809 = vadd.f32 0.0, %v808
      %810 = vmatmul.bf16.gmra.mxu0 %v417
      %v811 = vpop.f32.mrf.mxu0
      %v812 = vadd.f32 0.0, %v811
      %v813 = vpop.f32.mrf.mxu0
      %v814 = vadd.f32 0.0, %v813
      %815 = vmatmul.bf16.gmra.mxu0 %v790
      %v816 = vpop.f32.mrf.mxu0
      %v817 = vadd.f32 0.0, %v816
      %v818 = vpop.f32.mrf.mxu0
      %v819 = vadd.f32 0.0, %v818
      %820 = vdwg.mxu0
      %v821 = vadd.f32 %v763, %v802
      %v822 = vadd.f32 %v764, %v804
      %v823 = vadd.f32 %v765, %v807
      %v824 = vadd.f32 %v766, %v809
      %v825 = vadd.f32 %v767, %v812
      %v826 = vadd.f32 %v768, %v814
      %v827 = vadd.f32 %v769, %v817
      %v828 = vadd.f32 %v770, %v819
      %v831 = vrot.slane %v273, 1
      %v832 = vrot.slane %v274, 1
      %v833 = vsel %vm299, %v831, %v832
      %v835 = vpack.c.bf16 %v833, %v625
      %s836 = scalar_lea.vmem %s1, 112
      %v837 = vld [vmem:[%s836] sm:$0xf]
      %v838 = vld [vmem:[%s836 + $0x4] sm:$0xf]
      %v839 = vld [vmem:[%s836 + $0x8] sm:$0xf]
      %v840 = vld [vmem:[%s836 + $0xc] sm:$0xf]
      %v845 = vunpack.c.l.b16 %v837
      %v846 = vunpack.c.l.b16 %v838
      %v847 = vunpack.c.l.b16 %v839
      %v848 = vunpack.c.l.b16 %v840
      %v849 = vpack.c.b16 %v846, %v845
      %v850 = vpack.c.b16 %v848, %v847
      %v854 = vsel %vm353, %v835, 0
      %856 = vmatpush.bf16.msra.mxu0 0
      %857 = vmatpush.bf16.msra.mxu0 0
      %858 = vmatpush.bf16.msra.mxu0 0
      %859 = vmatpush.bf16.msra.mxu0 0
      %860 = vmatpush.bf16.msra.mxu0 0
      %861 = vmatpush.bf16.msra.mxu0 0
      %862 = vmatpush.bf16.msra.mxu0 %v850
      %863 = vmatpush.bf16.msra.mxu0 %v849
      %864 = vmatmul.bf16.gmra.mxu0 %v358
      %v865 = vpop.f32.mrf.mxu0
      %v866 = vadd.f32 0.0, %v865
      %v867 = vpop.f32.mrf.mxu0
      %v868 = vadd.f32 0.0, %v867
      %869 = vmatmul.bf16.gmra.mxu0 %v361
      %v870 = vpop.f32.mrf.mxu0
      %v871 = vadd.f32 0.0, %v870
      %v872 = vpop.f32.mrf.mxu0
      %v873 = vadd.f32 0.0, %v872
      %874 = vmatmul.bf16.gmra.mxu0 %v364
      %v875 = vpop.f32.mrf.mxu0
      %v876 = vadd.f32 0.0, %v875
      %v877 = vpop.f32.mrf.mxu0
      %v878 = vadd.f32 0.0, %v877
      %879 = vmatmul.bf16.gmra.mxu0 %v854
      %v880 = vpop.f32.mrf.mxu0
      %v881 = vadd.f32 0.0, %v880
      %v882 = vpop.f32.mrf.mxu0
      %v883 = vadd.f32 0.0, %v882
      %884 = vdwg.mxu0
      %v885 = vadd.f32 %v821, %v866
      %v886 = vadd.f32 %v822, %v868
      %v887 = vadd.f32 %v823, %v871
      %v888 = vadd.f32 %v824, %v873
      %v889 = vadd.f32 %v825, %v876
      %v890 = vadd.f32 %v826, %v878
      %v891 = vadd.f32 %v827, %v881
      %v892 = vadd.f32 %v828, %v883
      %v893 = vrot.slane %v273, 2
      %v894 = vrot.slane %v274, 2
      %v895 = vsel %vm448, %v893, %v894
      %v897 = vpack.c.bf16 %v895, %v699
      %s898 = scalar_lea.vmem %s1, 128
      %v899 = vld [vmem:[%s898] sm:$0xf]
      %v900 = vld [vmem:[%s898 + $0x4] sm:$0xf]
      %v901 = vld [vmem:[%s898 + $0x8] sm:$0xf]
      %v902 = vld [vmem:[%s898 + $0xc] sm:$0xf]
      %v907 = vunpack.c.l.b16 %v899
      %v908 = vunpack.c.l.b16 %v900
      %v909 = vunpack.c.l.b16 %v901
      %v910 = vunpack.c.l.b16 %v902
      %v911 = vpack.c.b16 %v908, %v907
      %v912 = vpack.c.b16 %v910, %v909
      %v916 = vsel %vm353, %v897, 0
      %918 = vmatpush.bf16.msra.mxu0 0
      %919 = vmatpush.bf16.msra.mxu0 0
      %920 = vmatpush.bf16.msra.mxu0 0
      %921 = vmatpush.bf16.msra.mxu0 0
      %922 = vmatpush.bf16.msra.mxu0 0
      %923 = vmatpush.bf16.msra.mxu0 0
      %924 = vmatpush.bf16.msra.mxu0 %v912
      %925 = vmatpush.bf16.msra.mxu0 %v911
      %926 = vmatmul.bf16.gmra.mxu0 %v506
      %v927 = vpop.f32.mrf.mxu0
      %v928 = vadd.f32 0.0, %v927
      %v929 = vpop.f32.mrf.mxu0
      %v930 = vadd.f32 0.0, %v929
      %931 = vmatmul.bf16.gmra.mxu0 %v509
      %v932 = vpop.f32.mrf.mxu0
      %v933 = vadd.f32 0.0, %v932
      %v934 = vpop.f32.mrf.mxu0
      %v935 = vadd.f32 0.0, %v934
      %936 = vmatmul.bf16.gmra.mxu0 %v512
      %v937 = vpop.f32.mrf.mxu0
      %v938 = vadd.f32 0.0, %v937
      %v939 = vpop.f32.mrf.mxu0
      %v940 = vadd.f32 0.0, %v939
      %941 = vmatmul.bf16.gmra.mxu0 %v916
      %v942 = vpop.f32.mrf.mxu0
      %v943 = vadd.f32 0.0, %v942
      %v944 = vpop.f32.mrf.mxu0
      %v945 = vadd.f32 0.0, %v944
      %946 = vdwg.mxu0
      %v947 = vadd.f32 %v885, %v928
      %v948 = vadd.f32 %v886, %v930
      %v949 = vadd.f32 %v887, %v933
      %v950 = vadd.f32 %v888, %v935
      %v951 = vadd.f32 %v889, %v938
      %v952 = vadd.f32 %v890, %v940
      %v953 = vadd.f32 %v891, %v943
      %v954 = vadd.f32 %v892, %v945
      %v955 = vld [vmem:[%s2] sm:$0x1]
      %v957 = vperm.slane %v955, 0
      %v959 = vmul.f32 %v947, %v957
      %v960 = vmul.f32 %v948, %v957
      %v961 = vmul.f32 %v949, %v957
      %v962 = vmul.f32 %v950, %v957
      %v963 = vmul.f32 %v951, %v957
      %v964 = vmul.f32 %v952, %v957
      %v965 = vmul.f32 %v953, %v957
      %v966 = vmul.f32 %v954, %v957
      %v967 = vld [vmem:[%s3] sm:$0x1]
      %v969 = vperm.slane %v967, 0
      %v971 = vadd.f32 %v959, %v969
      %v972 = vadd.f32 %v960, %v969
      %v973 = vadd.f32 %v961, %v969
      %v974 = vadd.f32 %v962, %v969
      %v975 = vadd.f32 %v963, %v969
      %v976 = vadd.f32 %v964, %v969
      %v977 = vadd.f32 %v965, %v969
      %v978 = vadd.f32 %v966, %v969
      %v979 = vsel %vm353, %v971, 0.0
      %v980 = vsel %vm353, %v972, 0.0
      %v981 = vadd.f32 %v979, %v980
      %v982 = vsel %vm353, %v973, 0.0
      %v983 = vadd.f32 %v981, %v982
      %v984 = vsel %vm353, %v974, 0.0
      %v985 = vadd.f32 %v983, %v984
      %v986 = vsel %vm353, %v975, 0.0
      %v987 = vadd.f32 %v985, %v986
      %v988 = vsel %vm353, %v976, 0.0
      %v989 = vadd.f32 %v987, %v988
      %v990 = vsel %vm353, %v977, 0.0
      %v991 = vadd.f32 %v989, %v990
      %v992 = vsel %vm353, %v978, 0.0
      %v993 = vadd.f32 %v991, %v992
      %v994 = vrot.slane %v993, 4
      %v995 = vadd.f32 %v993, %v994
      %v996 = vrot.slane %v995, 2
      %v997 = vadd.f32 %v995, %v996
      %v998 = vrot.slane %v997, 1
      %v999 = vadd.f32 %v997, %v998
      %v1000 = vrcp.pop 64.0
      %v1001 = vmul.f32 64.0, %v1000
      %v1002 = vsub.f32 1.0, %v1001
      %v1003 = vmul.f32 %v1000, %v1002
      %v1004 = vadd.f32 %v1000, %v1003
      %vm1005 = vweird.f32 %v1000
      %v1006 = vsel %vm1005, %v1000, %v1004
      %v1007 = vmul.f32 %v999, %v1006
      %vm1008 = vcmask 253952
      %1009 = vst.msk [vmem:[%s233] sm:$0x1] %vm1008, %v1007
      %v1010 = vpack.c.bf16 %v971, %v971
      %v1011 = vpack.c.bf16 %v972, %v972
      %v1012 = vpack.c.bf16 %v973, %v973
      %v1013 = vpack.c.bf16 %v974, %v974
      %v1014 = vpack.c.bf16 %v975, %v975
      %v1015 = vpack.c.bf16 %v976, %v976
      %v1016 = vpack.c.bf16 %v977, %v977
      %v1017 = vpack.c.bf16 %v978, %v978
      %vm1018 = vcmask 257024
      %1019 = vst.msk [vmem:[%s230] sm:$0xf] %vm1018, %v1010
      %1020 = vst.msk [vmem:[%s230 + $0x4] sm:$0xf] %vm1018, %v1011
      %1021 = vst.msk [vmem:[%s230 + $0x8] sm:$0xf] %vm1018, %v1012
      %1022 = vst.msk [vmem:[%s230 + $0xc] sm:$0xf] %vm1018, %v1013
      %1023 = vst.msk [vmem:[%s230 + $0x10] sm:$0xf] %vm1018, %v1014
      %1024 = vst.msk [vmem:[%s230 + $0x14] sm:$0xf] %vm1018, %v1015
      %1025 = vst.msk [vmem:[%s230 + $0x18] sm:$0xf] %vm1018, %v1016
      %1026 = vst.msk [vmem:[%s230 + $0x1c] sm:$0xf] %vm1018, %v1017
      %p1027 = scmp.lt.s32.totalorder %s17, 1
      %s1028 = scalar_select %p1027, %s17, 1
      %s1029 = smul.addr %s1028, 8
      %s1030 = smul.addr %s1029, 4
      %s1031 = scalar_lea.vmem %s4, %s1030
      %p1032 = scmp.lt.s32.totalorder %s17, 1
      %s1033 = scalar_select %p1032, %s17, 1
      %s1034 = scalar_lea.vmem %s5, %s1033
      // Predicated region
      $region37: #{basic_block_forward.5} parent=35 // pred_check
        %p1035 = pneg %p124
      $region38: #{basic_block_forward.5} parent=35 // pred_check_branch
        %1037 = sbr.rel (%p1035) target = $region40
      $region39: #{basic_block_forward.5} parent=35 // pred_region
        _
      $region40: #{basic_block_forward.5} parent=35 // pred_fallthru
        _
      // Predicated region
      $region41: #{basic_block_forward.5} parent=35 // pred_check
        %p1038 = pneg %p150
      $region42: #{basic_block_forward.5} parent=35 // pred_check_branch
        %1040 = sbr.rel (%p1038) target = $region44
      $region43: #{basic_block_forward.5} parent=35 // pred_region
        _
      $region44: #{basic_block_forward.5} parent=35 // pred_fallthru
        _
    $region36: #{basic_block_forward.5} parent=5 // pred_fallthru
      _
    %p1041 = scmp.le.s32.totalorder 2, %s12
    // Predicated region
    $region45: #{basic_block_forward.5} parent=5 // pred_check
      %p1042 = pneg %p1041
    $region46: #{basic_block_forward.5} parent=5 // pred_check_branch
      %1044 = sbr.rel (%p1042) target = $region48
    $region47: #{basic_block_forward.5} parent=5 // pred_region
      %s1045 = ssub.s32 %s12, 2
      // Predicated region
      $region49: #{basic_block_forward.5} parent=47 // pred_check
        %p1046 = pneg %p130
      $region50: #{basic_block_forward.5} parent=47 // pred_check_branch
        %1048 = sbr.rel (%p1046) target = $region52
      $region51: #{basic_block_forward.5} parent=47 // pred_region
        %p1049 = scmp.lt.s32.totalorder %s18, 1
        %s1050 = scalar_select %p1049, %s18, 1
        %s1051 = smul.addr %s1050, 8
        %s1052 = smul.addr %s1051, 4
        %s1053 = scalar_lea.vmem %s4, %s1052
      $region52: #{basic_block_forward.5} parent=47 // pred_fallthru
        _
      // Predicated region
      $region53: #{basic_block_forward.5} parent=47 // pred_check
        %p1054 = pneg %p156
      $region54: #{basic_block_forward.5} parent=47 // pred_check_branch
        %1056 = sbr.rel (%p1054) target = $region56
      $region55: #{basic_block_forward.5} parent=47 // pred_region
        %p1057 = scmp.lt.s32.totalorder %s18, 1
        %s1058 = scalar_select %p1057, %s18, 1
        %s1059 = scalar_lea.vmem %s5, %s1058
      $region56: #{basic_block_forward.5} parent=47 // pred_fallthru
        _
    $region48: #{basic_block_forward.5} parent=5 // pred_fallthru
      _
  $region6: #{basic_block_forward.5} parent=0 // loop_footer
    %s16 = sadd.s32 1, %s12
  $region7: #{basic_block_forward.5} parent=0 // loop_footer_branch
    %11 = sbr.rel target = $region3
  $region8: #{basic_block_forward.5} parent=0 // loop_exit
    _

// kernel: basic_block_forward.7
$region0: #{basic_block_forward.7}
  #allocation0 [shape = 'u32[]', space=smem, size = 0x4, offset = 0x4, fixed_abs, tag = 'smem constant byte address 0x4 - core index']
  #allocation1 [shape = 'u32[72,128]{1,0:T(1,128)}', space=vmem, size = 0x9000, scoped, tag = 'internal scratch']
  %s0 = inlined_call_operand.vmem [shape: bf16[2,16,128], index: 0, kind: input, shape index: {}]
  %s1 = inlined_call_operand.vmem [shape: f32[2,16,128], index: 1, kind: input, shape index: {}]
  %s2 = inlined_call_operand.vmem [shape: f32[2,1,128], index: 2, kind: input, shape index: {}]
  %s3 = inlined_call_operand.vmem [shape: f32[2,16,128], index: 3, kind: output, shape index: {}]
  %s4 = sld [smem:[#allocation0]]
  $region45: #{basic_block_forward.7} parent=0
    _
  %s6 = ssub.s32 1, %s4
  %s7 = scalar_select 0, %s6, %s4
  loop: start=0, step=1, limit=4
  $region2: #{basic_block_forward.7} parent=0 // loop_pre_header
    _
  $region3: #{basic_block_forward.7} parent=0 // loop_header
    %s9 = sphi 0, %s13
    %p10 = scmp.ge.s32.totalorder %s9, 4
    %s19 = sphi 0, %s21
    %s22 = sphi 0, %s19
    %s23 = sphi 0, %s22
    %s39 = sphi 0, %s23
    %s45 = sphi 0, %s47
    %s48 = sphi 0, %s45
    %s49 = sphi 0, %s48
    %s65 = sphi 0, %s49
    %s71 = sphi 0, %s73
    %s74 = sphi 0, %s71
    %s75 = sphi 0, %s74
    %s91 = sphi 0, %s75
    %s97 = sphi 0, %s99
    %s100 = sphi 0, %s97
    %s101 = sphi 0, %s100
    %s117 = sphi 0, %s101
  $region4: #{basic_block_forward.7} parent=0 // loop_header_branch
    %12 = sbr.rel (%p10) target = $region8
  $region5: #{basic_block_forward.7} parent=0 // loop_body
    %s14 = ssub.s32 %s9, 1
    %s15 = ssub.s32 %s9, 2
    %s16 = sadd.s32 %s9, 1
    %s17 = ssub.s32 %s9, %s16
    %p18 = scmp.eq.s32.totalorder %s17, 0
    %s20 = sadd.s32 %s19, 1
    %s21 = scalar_select %p18, %s19, %s20
    %p24 = pneg %p18
    %p25 = scmp.eq.s32.totalorder %s9, 1
    %p26 = por %p24, %p25
    %p27 = scmp.ne.s32.totalorder %s19, %s22
    %p28 = scmp.eq.s32.totalorder %s9, 0
    %p29 = por %p27, %p28
    %p30 = scmp.ne.s32.totalorder %s19, %s22
    %p31 = scmp.eq.s32.totalorder %s14, 1
    %p32 = por %p30, %p31
    %p33 = scmp.ne.s32.totalorder %s22, %s23
    %p34 = scmp.eq.s32.totalorder %s14, 0
    %p35 = por %p33, %p34
    %p36 = scmp.ne.s32.totalorder %s22, %s23
    %p37 = scmp.eq.s32.totalorder %s15, 1
    %p38 = por %p36, %p37
    %p40 = scmp.ne.s32.totalorder %s23, %s39
    %p41 = scmp.eq.s32.totalorder %s15, 0
    %p42 = por %p40, %p41
    %s43 = ssub.s32 %s9, %s16
    %p44 = scmp.eq.s32.totalorder %s43, 0
    %s46 = sadd.s32 %s45, 1
    %s47 = scalar_select %p44, %s45, %s46
    %p50 = pneg %p44
    %p51 = scmp.eq.s32.totalorder %s9, 1
    %p52 = por %p50, %p51
    %p53 = scmp.ne.s32.totalorder %s45, %s48
    %p54 = scmp.eq.s32.totalorder %s9, 0
    %p55 = por %p53, %p54
    %p56 = scmp.ne.s32.totalorder %s45, %s48
    %p57 = scmp.eq.s32.totalorder %s14, 1
    %p58 = por %p56, %p57
    %p59 = scmp.ne.s32.totalorder %s48, %s49
    %p60 = scmp.eq.s32.totalorder %s14, 0
    %p61 = por %p59, %p60
    %p62 = scmp.ne.s32.totalorder %s48, %s49
    %p63 = scmp.eq.s32.totalorder %s15, 1
    %p64 = por %p62, %p63
    %p66 = scmp.ne.s32.totalorder %s49, %s65
    %p67 = scmp.eq.s32.totalorder %s15, 0
    %p68 = por %p66, %p67
    %s69 = ssub.s32 %s9, %s16
    %p70 = scmp.eq.s32.totalorder %s69, 0
    %s72 = sadd.s32 %s71, 1
    %s73 = scalar_select %p70, %s71, %s72
    %p76 = pneg %p70
    %p77 = scmp.eq.s32.totalorder %s9, 1
    %p78 = por %p76, %p77
    %p79 = scmp.ne.s32.totalorder %s71, %s74
    %p80 = scmp.eq.s32.totalorder %s9, 0
    %p81 = por %p79, %p80
    %p82 = scmp.ne.s32.totalorder %s71, %s74
    %p83 = scmp.eq.s32.totalorder %s14, 1
    %p84 = por %p82, %p83
    %p85 = scmp.ne.s32.totalorder %s74, %s75
    %p86 = scmp.eq.s32.totalorder %s14, 0
    %p87 = por %p85, %p86
    %p88 = scmp.ne.s32.totalorder %s74, %s75
    %p89 = scmp.eq.s32.totalorder %s15, 1
    %p90 = por %p88, %p89
    %p92 = scmp.ne.s32.totalorder %s75, %s91
    %p93 = scmp.eq.s32.totalorder %s15, 0
    %p94 = por %p92, %p93
    %s95 = ssub.s32 %s9, %s16
    %p96 = scmp.eq.s32.totalorder %s95, 0
    %s98 = sadd.s32 %s97, 1
    %s99 = scalar_select %p96, %s97, %s98
    %p102 = pneg %p96
    %p103 = scmp.eq.s32.totalorder %s9, 1
    %p104 = por %p102, %p103
    %p105 = scmp.ne.s32.totalorder %s97, %s100
    %p106 = scmp.eq.s32.totalorder %s9, 0
    %p107 = por %p105, %p106
    %p108 = scmp.ne.s32.totalorder %s97, %s100
    %p109 = scmp.eq.s32.totalorder %s14, 1
    %p110 = por %p108, %p109
    %p111 = scmp.ne.s32.totalorder %s100, %s101
    %p112 = scmp.eq.s32.totalorder %s14, 0
    %p113 = por %p111, %p112
    %p114 = scmp.ne.s32.totalorder %s100, %s101
    %p115 = scmp.eq.s32.totalorder %s15, 1
    %p116 = por %p114, %p115
    %p118 = scmp.ne.s32.totalorder %s101, %s117
    %p119 = scmp.eq.s32.totalorder %s15, 0
    %p120 = por %p118, %p119
    %p121 = scmp.le.s32.totalorder 1, %s9
    %p122 = scmp.lt.s32.totalorder %s9, 3
    %p123 = pnand %p121, %p122
    %p124 = pneg %p123
    // Predicated region
    $region9: #{basic_block_forward.7} parent=5 // pred_check
      _
    $region10: #{basic_block_forward.7} parent=5 // pred_check_branch
      %126 = sbr.rel (%p123) target = $region12
    $region11: #{basic_block_forward.7} parent=5 // pred_region
      %s127 = ssub.s32 %s9, 1
    $region12: #{basic_block_forward.7} parent=5 // pred_fallthru
      _
    %p128 = scmp.lt.s32.totalorder %s9, 2
    // Predicated region
    $region13: #{basic_block_forward.7} parent=5 // pred_check
      %p129 = pneg %p128
    $region14: #{basic_block_forward.7} parent=5 // pred_check_branch
      %131 = sbr.rel (%p129) target = $region16
    $region15: #{basic_block_forward.7} parent=5 // pred_region
      // Predicated region
      $region17: #{basic_block_forward.7} parent=15 // pred_check
        %p132 = pneg %p29
      $region18: #{basic_block_forward.7} parent=15 // pred_check_branch
        %134 = sbr.rel (%p132) target = $region20
      $region19: #{basic_block_forward.7} parent=15 // pred_region
        %p135 = scmp.lt.s32.totalorder %s9, 1
        %s136 = scalar_select %p135, %s9, 1
        %s137 = smul.addr %s136, 2
        %s138 = smul.addr %s137, 4
        %s139 = scalar_lea.vmem %s0, %s138
      $region20: #{basic_block_forward.7} parent=15 // pred_fallthru
        _
      // Predicated region
      $region21: #{basic_block_forward.7} parent=15 // pred_check
        %p140 = pneg %p55
      $region22: #{basic_block_forward.7} parent=15 // pred_check_branch
        %142 = sbr.rel (%p140) target = $region24
      $region23: #{basic_block_forward.7} parent=15 // pred_region
        %p143 = scmp.lt.s32.totalorder %s9, 1
        %s144 = scalar_select %p143, %s9, 1
        %s145 = smul.addr %s144, 2
        %s146 = smul.addr %s145, 8
        %s147 = scalar_lea.vmem %s1, %s146
      $region24: #{basic_block_forward.7} parent=15 // pred_fallthru
        _
      // Predicated region
      $region25: #{basic_block_forward.7} parent=15 // pred_check
        %p148 = pneg %p81
      $region26: #{basic_block_forward.7} parent=15 // pred_check_branch
        %150 = sbr.rel (%p148) target = $region28
      $region27: #{basic_block_forward.7} parent=15 // pred_region
        %p151 = scmp.lt.s32.totalorder %s9, 1
        %s152 = scalar_select %p151, %s9, 1
        %s153 = scalar_lea.vmem %s2, %s152
      $region28: #{basic_block_forward.7} parent=15 // pred_fallthru
        _
    $region16: #{basic_block_forward.7} parent=5 // pred_fallthru
      _
    %p154 = scmp.le.s32.totalorder 1, %s9
    %p155 = scmp.lt.s32.totalorder %s9, 3
    %p156 = pnand %p154, %p155
    %p157 = pneg %p156
    // Predicated region
    $region29: #{basic_block_forward.7} parent=5 // pred_check
      _
    $region30: #{basic_block_forward.7} parent=5 // pred_check_branch
      %159 = sbr.rel (%p156) target = $region32
    $region31: #{basic_block_forward.7} parent=5 // pred_region
      %s160 = ssub.s32 %s9, 1
      %p161 = scmp.lt.s32.totalorder %s14, 1
      %s162 = scalar_select %p161, %s14, 1
      %s163 = smul.addr %s162, 2
      %s164 = smul.addr %s163, 4
      %s165 = scalar_lea.vmem %s0, %s164
      %p166 = pneg %p35
      %p167 = pneg %p32
      %p168 = scmp.lt.s32.totalorder %s14, 1
      %s169 = scalar_select %p168, %s14, 1
      %s170 = smul.addr %s169, 2
      %s171 = smul.addr %s170, 8
      %s172 = scalar_lea.vmem %s1, %s171
      %p173 = pneg %p61
      %p174 = pneg %p58
      %p175 = scmp.lt.s32.totalorder %s14, 1
      %s176 = scalar_select %p175, %s14, 1
      %s177 = scalar_lea.vmem %s2, %s176
      %p178 = pneg %p87
      %p179 = pneg %p84
      %p180 = pneg %p113
      %p181 = pneg %p110
      %p182 = scmp.lt.s32.totalorder %s14, 1
      %s183 = scalar_select %p182, %s14, 1
      %s184 = smul.addr %s183, 2
      %s185 = smul.addr %s184, 8
      %s186 = scalar_lea.vmem %s3, %s185
      %p187 = scmp.lt.s32.totalorder %s14, 1
      %s188 = scalar_select %p187, %s14, 1
      %s189 = smul.addr %s188, 2
      %s190 = smul.addr %s189, 4
      %s191 = scalar_lea.vmem %s0, %s190
      %p192 = scmp.lt.s32.totalorder %s14, 1
      %s193 = scalar_select %p192, %s14, 1
      %s194 = smul.addr %s193, 2
      %s195 = smul.addr %s194, 8
      %s196 = scalar_lea.vmem %s1, %s195
      %p197 = scmp.lt.s32.totalorder %s14, 1
      %s198 = scalar_select %p197, %s14, 1
      %s199 = scalar_lea.vmem %s2, %s198
      %p200 = scmp.lt.s32.totalorder %s14, 1
      %s201 = scalar_select %p200, %s14, 1
      %s202 = smul.addr %s201, 2
      %s203 = smul.addr %s202, 8
      %s204 = scalar_lea.vmem %s3, %s203
      %v205 = vld [vmem:[%s191] sm:$0xf]
      %v206 = vld [vmem:[%s191 + $0x4] sm:$0xf]
      %v207 = vunpack.c.l.bf16 %v205
      %v208 = vunpack.c.l.bf16 %v206
      %v209 = vld [vmem:[%s196] sm:$0xff]
      %v210 = vld [vmem:[%s196 + $0x8] sm:$0xff]
      %v211 = vld [vmem:[%s199] sm:$0x1]
      %v213 = vperm.slane %v211, 0
      %v215 = vmul.f32 %v207, %v213
      %v216 = vmul.f32 %v208, %v213
      %v217 = vadd.f32 %v215, %v209
      %v218 = vadd.f32 %v216, %v210
      %v219 = vmax.f32 %v217, 0.0
      %v220 = vmax.f32 %v218, 0.0
      %221 = vst [vmem:[%s204] sm:$0xff] %v219
      %222 = vst [vmem:[%s204 + $0x8] sm:$0xff] %v220
      %p223 = scmp.lt.s32.totalorder %s14, 1
      %s224 = scalar_select %p223, %s14, 1
      %s225 = smul.addr %s224, 2
      %s226 = smul.addr %s225, 8
      %s227 = scalar_lea.vmem %s3, %s226
      // Predicated region
      $region33: #{basic_block_forward.7} parent=31 // pred_check
        %p228 = pneg %p110
      $region34: #{basic_block_forward.7} parent=31 // pred_check_branch
        %230 = sbr.rel (%p228) target = $region36
      $region35: #{basic_block_forward.7} parent=31 // pred_region
        _
      $region36: #{basic_block_forward.7} parent=31 // pred_fallthru
        _
    $region32: #{basic_block_forward.7} parent=5 // pred_fallthru
      _
    %p231 = scmp.le.s32.totalorder 2, %s9
    // Predicated region
    $region37: #{basic_block_forward.7} parent=5 // pred_check
      %p232 = pneg %p231
    $region38: #{basic_block_forward.7} parent=5 // pred_check_branch
      %234 = sbr.rel (%p232) target = $region40
    $region39: #{basic_block_forward.7} parent=5 // pred_region
      %s235 = ssub.s32 %s9, 2
      // Predicated region
      $region41: #{basic_block_forward.7} parent=39 // pred_check
        %p236 = pneg %p116
      $region42: #{basic_block_forward.7} parent=39 // pred_check_branch
        %238 = sbr.rel (%p236) target = $region44
      $region43: #{basic_block_forward.7} parent=39 // pred_region
        %p239 = scmp.lt.s32.totalorder %s15, 1
        %s240 = scalar_select %p239, %s15, 1
        %s241 = smul.addr %s240, 2
        %s242 = smul.addr %s241, 8
        %s243 = scalar_lea.vmem %s3, %s242
      $region44: #{basic_block_forward.7} parent=39 // pred_fallthru
        _
    $region40: #{basic_block_forward.7} parent=5 // pred_fallthru
      _
  $region6: #{basic_block_forward.7} parent=0 // loop_footer
    %s13 = sadd.s32 1, %s9
  $region7: #{basic_block_forward.7} parent=0 // loop_footer_branch
    %8 = sbr.rel target = $region3
  $region8: #{basic_block_forward.7} parent=0 // loop_exit
    _

</llo_original>
